<compile_context>
chip_gen: v7x
topology: tpu7x:2x2x1
jax: 0.10.0
libtpu: 0.0.40
codegen_flags: <defaults>
</compile_context>

<pallas_src>
import functools
import math

import jax
import jax.numpy as jnp
import numpy as np
from jax.experimental import pallas as pl
from jax.experimental.pallas import tpu as pltpu


def mha_kernel(q_ref, k_ref, v_ref, wqkv_ref, bqkv_ref, wf_ref, fin_ref, o_ref,
               *, batch, len_q, len_kv, n_head, d_k, d_v, eps):
    # Refs (all whole-array VMEM blocks):
    #   q_ref: (B*Lq, D)   k_ref/v_ref: (B*Lkv, D)
    #   wqkv_ref: (D, H*(2*dk + dv))   columns ordered [q heads | k heads | v heads]
    #   bqkv_ref: (1, H*(2*dk + dv))
    #   wf_ref:   (H*dv, D)            rows in head-major order (matches torch fc weight)
    #   fin_ref:  (3, D)               rows [fc bias, ln gamma, ln beta]
    f32 = jnp.float32
    q2 = q_ref[...].astype(f32)
    k2 = k_ref[...].astype(f32)
    v2 = v_ref[...].astype(f32)
    hk = n_head * d_k
    hv = n_head * d_v

    w = wqkv_ref[...].astype(f32)
    b = bqkv_ref[...].astype(f32)

    # --- Q/K/V projections: three flat 2D MXU matmuls. ---
    qp = jnp.dot(q2, w[:, :hk], preferred_element_type=f32) + b[:, :hk]
    kp = jnp.dot(k2, w[:, hk:2 * hk], preferred_element_type=f32) + b[:, hk:2 * hk]
    vp = jnp.dot(v2, w[:, 2 * hk:2 * hk + hv],
                 preferred_element_type=f32) + b[:, 2 * hk:2 * hk + hv]

    # --- Fold heads into the batch axis: (H*B, L, d). ---
    qp3 = qp.reshape(batch, len_q, hk)
    kp3 = kp.reshape(batch, len_kv, hk)
    vp3 = vp.reshape(batch, len_kv, hv)
    q_hb = jnp.concatenate(
        [qp3[:, :, h * d_k:(h + 1) * d_k] for h in range(n_head)], axis=0)
    k_hb = jnp.concatenate(
        [kp3[:, :, h * d_k:(h + 1) * d_k] for h in range(n_head)], axis=0)
    v_hb = jnp.concatenate(
        [vp3[:, :, h * d_v:(h + 1) * d_v] for h in range(n_head)], axis=0)

    # --- Scaled dot-product attention (unmasked path), head-batched. ---
    inv_temp = f32(1.0 / math.sqrt(d_k))
    s = jnp.einsum('bqe,bke->bqk', q_hb, k_hb, preferred_element_type=f32) * inv_temp
    s = s - jnp.max(s, axis=-1, keepdims=True)
    p = jnp.exp(s)
    p = p / jnp.sum(p, axis=-1, keepdims=True)   # exact softmax (approx recip removed)
    o_hb = jnp.einsum('bqk,bke->bqe', p, v_hb, preferred_element_type=f32)  # (H*B, Lq, dv)

    # --- Re-join heads on the lane axis; one 2D output-projection matmul. ---
    o_cat = jnp.concatenate(
        [o_hb[h * batch:(h + 1) * batch].reshape(batch * len_q, d_v)
         for h in range(n_head)], axis=-1)                       # (B*Lq, H*dv)
    out = jnp.dot(o_cat, wf_ref[...].astype(f32), preferred_element_type=f32)

    # --- fc bias + residual + LayerNorm over the model dim. ---
    fin = fin_ref[...].astype(f32)
    out = out + fin[0:1, :] + q2
    mean = jnp.mean(out, axis=-1, keepdims=True)
    var = jnp.mean(jnp.square(out - mean), axis=-1, keepdims=True)
    out = (out - mean) / jnp.sqrt(var + f32(eps))
    out = out * fin[1:2, :] + fin[2:3, :]

    o_ref[...] = out.astype(o_ref.dtype)


def pack_params(params):
    """Pack the 10 weight/bias/LN operands into four lane-dense 2D slabs."""
    wqkv = jnp.concatenate([params["wq"], params["wk"], params["wv"]], axis=1)  # (D, 3H*dk)
    bqkv = jnp.concatenate([params["bq"], params["bk"], params["bv"]], axis=1)  # (1, 3H*dk)
    fin = jnp.concatenate([params["bf"], params["ln_g"], params["ln_b"]], axis=0)  # (3, D)
    return wqkv, bqkv, params["wf"], fin


def multihead_attention(q, k, v, params, *, n_head, d_k, d_v, eps=1e-5):
    B, Lq, D = q.shape
    _, Lk, _ = k.shape
    _, Lv, _ = v.shape
    assert Lk == Lv, "attention requires len_k == len_v (see semantics note)"

    wqkv, bqkv, wf, fin = pack_params(params)

    kernel = functools.partial(
        mha_kernel, batch=B, len_q=Lq, len_kv=Lk,
        n_head=n_head, d_k=d_k, d_v=d_v, eps=eps)

    vmem = pl.BlockSpec(memory_space=pltpu.MemorySpace.VMEM)
    out2d = pl.pallas_call(
        kernel,
        out_shape=jax.ShapeDtypeStruct((B * Lq, D), q.dtype),
        in_specs=[vmem] * 7,
        out_specs=vmem,
    )(q.reshape(B * Lq, D), k.reshape(B * Lk, D), v.reshape(B * Lv, D),
      wqkv, bqkv, wf, fin)
    return out2d.reshape(B, Lq, D)


def reference_jnp(q, k, v, params, *, n_head, d_k, d_v, eps=1e-5):
    """Pure-jnp reference mirroring the PyTorch module (sanity check)."""
    Qp = q @ params["wq"] + params["bq"]
    Kp = k @ params["wk"] + params["bk"]
    Vp = v @ params["wv"] + params["bv"]
    outs = []
    for h in range(n_head):
        Qh = Qp[..., h * d_k:(h + 1) * d_k]
        Kh = Kp[..., h * d_k:(h + 1) * d_k]
        Vh = Vp[..., h * d_v:(h + 1) * d_v]
        s = jnp.einsum("bqd,bkd->bqk", Qh, Kh) / math.sqrt(d_k)
        p = jax.nn.softmax(s, axis=-1)
        outs.append(jnp.einsum("bqk,bkd->bqd", p, Vh))
    o = jnp.concatenate(outs, axis=-1)
    o = o @ params["wf"] + params["bf"]
    o = o + q
    mean = jnp.mean(o, axis=-1, keepdims=True)
    var = jnp.mean((o - mean) ** 2, axis=-1, keepdims=True)
    o = (o - mean) / jnp.sqrt(var + eps)
    return o * params["ln_g"] + params["ln_b"]


def init_params(key, *, n_head, d_model, d_k, d_v):
    ks = jax.random.split(key, 4)
    std_qk = math.sqrt(2.0 / (d_model + d_k))
    std_v = math.sqrt(2.0 / (d_model + d_v))
    # Weights stored pre-transposed: (in, out).
    wq = jax.random.normal(ks[0], (d_model, n_head * d_k), jnp.float32) * std_qk
    wk = jax.random.normal(ks[1], (d_model, n_head * d_k), jnp.float32) * std_qk
    wv = jax.random.normal(ks[2], (d_model, n_head * d_v), jnp.float32) * std_v
    std_fc = math.sqrt(2.0 / (n_head * d_v + d_model))  # xavier normal
    wf = jax.random.normal(ks[3], (n_head * d_v, d_model), jnp.float32) * std_fc
    return {
        "wq": wq, "bq": jnp.zeros((1, n_head * d_k), jnp.float32),
        "wk": wk, "bk": jnp.zeros((1, n_head * d_k), jnp.float32),
        "wv": wv, "bv": jnp.zeros((1, n_head * d_v), jnp.float32),
        "wf": wf, "bf": jnp.zeros((1, d_model), jnp.float32),
        "ln_g": jnp.ones((1, d_model), jnp.float32),
        "ln_b": jnp.zeros((1, d_model), jnp.float32),
    }


if __name__ == "__main__":
    n_head, d_model, d_k, d_v = 2, 20, 5, 5
    B, Lq, Lkv = 4, 10, 16

    key = jax.random.PRNGKey(0)
    kx1, kx2, kx3, kp = jax.random.split(key, 4)
    x1 = jax.random.normal(kx1, (B, Lq, d_model), jnp.float32)    # query
    x2 = jax.random.normal(kx2, (B, Lkv, d_model), jnp.float32)   # key
    x3 = jax.random.normal(kx3, (B, Lkv, d_model), jnp.float32)   # value

    params = init_params(kp, n_head=n_head, d_model=d_model, d_k=d_k, d_v=d_v)

    out = multihead_attention(x1, x2, x3, params, n_head=n_head, d_k=d_k, d_v=d_v)
    out = jax.block_until_ready(out)

    ref = reference_jnp(x1, x2, x3, params, n_head=n_head, d_k=d_k, d_v=d_v)
    # The kernel no longer uses any approximate ops (exact softmax divide, exact LN).
    # The tolerance is kept conservative only to cover MXU-vs-XLA *default* f32 matmul
    # precision differences across TPU generations, not kernel approximations.
    np.testing.assert_allclose(np.asarray(out), np.asarray(ref), rtol=5e-3, atol=5e-3)

    assert out.shape == (B, Lq, d_model)
    print("KERNEL_OK")
</pallas_src>

<mosaic_0001>
module attributes {stable_mosaic.version = 11 : i64} {
  func.func @mha_kernel(%arg0: memref<40x20xf32, #tpu.memory_space<vmem>>, %arg1: memref<64x20xf32, #tpu.memory_space<vmem>>, %arg2: memref<64x20xf32, #tpu.memory_space<vmem>>, %arg3: memref<20x30xf32, #tpu.memory_space<vmem>>, %arg4: memref<1x30xf32, #tpu.memory_space<vmem>>, %arg5: memref<10x20xf32, #tpu.memory_space<vmem>>, %arg6: memref<3x20xf32, #tpu.memory_space<vmem>>, %arg7: memref<40x20xf32, #tpu.memory_space<vmem>>) attributes {dimension_semantics = [], scalar_prefetch = 0 : i64, scratch_operands = 0 : i64, tpu.core_type = #tpu.core_type<tc>} {
    %c0 = arith.constant 0 : index
    %c0_0 = arith.constant 0 : index
    %0 = vector.load %arg0[%c0, %c0_0] : memref<40x20xf32, #tpu.memory_space<vmem>>, vector<40x20xf32>
    %c0_1 = arith.constant 0 : index
    %c0_2 = arith.constant 0 : index
    %1 = vector.load %arg1[%c0_1, %c0_2] : memref<64x20xf32, #tpu.memory_space<vmem>>, vector<64x20xf32>
    %c0_3 = arith.constant 0 : index
    %c0_4 = arith.constant 0 : index
    %2 = vector.load %arg2[%c0_3, %c0_4] : memref<64x20xf32, #tpu.memory_space<vmem>>, vector<64x20xf32>
    %c0_5 = arith.constant 0 : index
    %c0_6 = arith.constant 0 : index
    %3 = vector.load %arg3[%c0_5, %c0_6] : memref<20x30xf32, #tpu.memory_space<vmem>>, vector<20x30xf32>
    %c0_7 = arith.constant 0 : index
    %c0_8 = arith.constant 0 : index
    %4 = vector.load %arg4[%c0_7, %c0_8] : memref<1x30xf32, #tpu.memory_space<vmem>>, vector<1x30xf32>
    %5 = vector.extract_strided_slice %3 {offsets = [0, 0], sizes = [20, 10], strides = [1, 1]} : vector<20x30xf32> to vector<20x10xf32>
    %cst = arith.constant dense<0.000000e+00> : vector<40x10xf32>
    %6 = tpu.matmul %0, %5, %cst {dimension_numbers = #tpu.dot_dimension_numbers<[1], [0], [0], [1], [0, 0, 1, 1], [], []>} : vector<40x20xf32>, vector<20x10xf32>, vector<40x10xf32> -> vector<40x10xf32>
    %7 = vector.extract_strided_slice %4 {offsets = [0, 0], sizes = [1, 10], strides = [1, 1]} : vector<1x30xf32> to vector<1x10xf32>
    %8 = vector.broadcast %7 : vector<1x10xf32> to vector<40x10xf32>
    %9 = arith.addf %6, %8 : vector<40x10xf32>
    %10 = vector.extract_strided_slice %3 {offsets = [0, 10], sizes = [20, 10], strides = [1, 1]} : vector<20x30xf32> to vector<20x10xf32>
    %cst_9 = arith.constant dense<0.000000e+00> : vector<64x10xf32>
    %11 = tpu.matmul %1, %10, %cst_9 {dimension_numbers = #tpu.dot_dimension_numbers<[1], [0], [0], [1], [0, 0, 1, 1], [], []>} : vector<64x20xf32>, vector<20x10xf32>, vector<64x10xf32> -> vector<64x10xf32>
    %12 = vector.extract_strided_slice %4 {offsets = [0, 10], sizes = [1, 10], strides = [1, 1]} : vector<1x30xf32> to vector<1x10xf32>
    %13 = vector.broadcast %12 : vector<1x10xf32> to vector<64x10xf32>
    %14 = arith.addf %11, %13 : vector<64x10xf32>
    %15 = vector.extract_strided_slice %3 {offsets = [0, 20], sizes = [20, 10], strides = [1, 1]} : vector<20x30xf32> to vector<20x10xf32>
    %cst_10 = arith.constant dense<0.000000e+00> : vector<64x10xf32>
    %16 = tpu.matmul %2, %15, %cst_10 {dimension_numbers = #tpu.dot_dimension_numbers<[1], [0], [0], [1], [0, 0, 1, 1], [], []>} : vector<64x20xf32>, vector<20x10xf32>, vector<64x10xf32> -> vector<64x10xf32>
    %17 = vector.extract_strided_slice %4 {offsets = [0, 20], sizes = [1, 10], strides = [1, 1]} : vector<1x30xf32> to vector<1x10xf32>
    %18 = vector.broadcast %17 : vector<1x10xf32> to vector<64x10xf32>
    %19 = arith.addf %16, %18 : vector<64x10xf32>
    %20 = vector.shape_cast %9 : vector<40x10xf32> to vector<4x10x10xf32>
    %21 = vector.shape_cast %14 : vector<64x10xf32> to vector<4x16x10xf32>
    %22 = vector.shape_cast %19 : vector<64x10xf32> to vector<4x16x10xf32>
    %23 = vector.extract_strided_slice %20 {offsets = [0, 0, 0], sizes = [4, 10, 5], strides = [1, 1, 1]} : vector<4x10x10xf32> to vector<4x10x5xf32>
    %24 = vector.extract_strided_slice %20 {offsets = [0, 0, 5], sizes = [4, 10, 5], strides = [1, 1, 1]} : vector<4x10x10xf32> to vector<4x10x5xf32>
    %25 = tpu.concatenate %23, %24 in 0 : vector<4x10x5xf32>, vector<4x10x5xf32> -> vector<8x10x5xf32>
    %26 = vector.extract_strided_slice %21 {offsets = [0, 0, 0], sizes = [4, 16, 5], strides = [1, 1, 1]} : vector<4x16x10xf32> to vector<4x16x5xf32>
    %27 = vector.extract_strided_slice %21 {offsets = [0, 0, 5], sizes = [4, 16, 5], strides = [1, 1, 1]} : vector<4x16x10xf32> to vector<4x16x5xf32>
    %28 = tpu.concatenate %26, %27 in 0 : vector<4x16x5xf32>, vector<4x16x5xf32> -> vector<8x16x5xf32>
    %29 = vector.extract_strided_slice %22 {offsets = [0, 0, 0], sizes = [4, 16, 5], strides = [1, 1, 1]} : vector<4x16x10xf32> to vector<4x16x5xf32>
    %30 = vector.extract_strided_slice %22 {offsets = [0, 0, 5], sizes = [4, 16, 5], strides = [1, 1, 1]} : vector<4x16x10xf32> to vector<4x16x5xf32>
    %31 = tpu.concatenate %29, %30 in 0 : vector<4x16x5xf32>, vector<4x16x5xf32> -> vector<8x16x5xf32>
    "tpu.trace_start"() <{level = 10 : i32, message = "bqe,bke->bqk"}> : () -> ()
    %cst_11 = arith.constant dense<0.000000e+00> : vector<8x10x16xf32>
    %32 = tpu.matmul %25, %28, %cst_11 {dimension_numbers = #tpu.dot_dimension_numbers<[2], [2], [1], [1], [0, 0, 0, 1, 1, 1], [0], [0]>} : vector<8x10x5xf32>, vector<8x16x5xf32>, vector<8x10x16xf32> -> vector<8x10x16xf32>
    "tpu.trace_stop"() : () -> ()
    %cst_12 = arith.constant 0.44721359 : f32
    %33 = vector.broadcast %cst_12 : f32 to vector<8x10x16xf32>
    %34 = arith.mulf %32, %33 : vector<8x10x16xf32>
    %cst_13 = arith.constant dense<0xFF800000> : vector<8x10xf32>
    %35 = vector.multi_reduction <maximumf>, %34, %cst_13 [2] : vector<8x10x16xf32> to vector<8x10xf32>
    %36 = vector.shape_cast %35 : vector<8x10xf32> to vector<8x10x1xf32>
    %37 = vector.broadcast %36 : vector<8x10x1xf32> to vector<8x10x16xf32>
    %38 = arith.subf %34, %37 : vector<8x10x16xf32>
    %39 = math.exp %38 : vector<8x10x16xf32>
    %cst_14 = arith.constant dense<0.000000e+00> : vector<8x10xf32>
    %40 = vector.multi_reduction <add>, %39, %cst_14 [2] : vector<8x10x16xf32> to vector<8x10xf32>
    %41 = vector.shape_cast %40 : vector<8x10xf32> to vector<8x10x1xf32>
    %42 = vector.broadcast %41 : vector<8x10x1xf32> to vector<8x10x16xf32>
    %43 = arith.divf %39, %42 : vector<8x10x16xf32>
    "tpu.trace_start"() <{level = 10 : i32, message = "bqk,bke->bqe"}> : () -> ()
    %cst_15 = arith.constant dense<0.000000e+00> : vector<8x10x5xf32>
    %44 = tpu.matmul %43, %31, %cst_15 {dimension_numbers = #tpu.dot_dimension_numbers<[2], [1], [1], [2], [0, 0, 0, 1, 1, 2], [0], [0]>} : vector<8x10x16xf32>, vector<8x16x5xf32>, vector<8x10x5xf32> -> vector<8x10x5xf32>
    "tpu.trace_stop"() : () -> ()
    %45 = vector.extract_strided_slice %44 {offsets = [0, 0, 0], sizes = [4, 10, 5], strides = [1, 1, 1]} : vector<8x10x5xf32> to vector<4x10x5xf32>
    %46 = vector.shape_cast %45 : vector<4x10x5xf32> to vector<40x5xf32>
    %47 = vector.extract_strided_slice %44 {offsets = [4, 0, 0], sizes = [4, 10, 5], strides = [1, 1, 1]} : vector<8x10x5xf32> to vector<4x10x5xf32>
    %48 = vector.shape_cast %47 : vector<4x10x5xf32> to vector<40x5xf32>
    %49 = tpu.concatenate %46, %48 in 1 : vector<40x5xf32>, vector<40x5xf32> -> vector<40x10xf32>
    %c0_16 = arith.constant 0 : index
    %c0_17 = arith.constant 0 : index
    %50 = vector.load %arg5[%c0_16, %c0_17] : memref<10x20xf32, #tpu.memory_space<vmem>>, vector<10x20xf32>
    %cst_18 = arith.constant dense<0.000000e+00> : vector<40x20xf32>
    %51 = tpu.matmul %49, %50, %cst_18 {dimension_numbers = #tpu.dot_dimension_numbers<[1], [0], [0], [1], [0, 0, 1, 1], [], []>} : vector<40x10xf32>, vector<10x20xf32>, vector<40x20xf32> -> vector<40x20xf32>
    %c0_19 = arith.constant 0 : index
    %c0_20 = arith.constant 0 : index
    %52 = vector.load %arg6[%c0_19, %c0_20] : memref<3x20xf32, #tpu.memory_space<vmem>>, vector<3x20xf32>
    %53 = vector.extract_strided_slice %52 {offsets = [0, 0], sizes = [1, 20], strides = [1, 1]} : vector<3x20xf32> to vector<1x20xf32>
    %54 = vector.broadcast %53 : vector<1x20xf32> to vector<40x20xf32>
    %55 = arith.addf %51, %54 : vector<40x20xf32>
    %56 = arith.addf %55, %0 : vector<40x20xf32>
    %cst_21 = arith.constant dense<0.000000e+00> : vector<40xf32>
    %57 = vector.multi_reduction <add>, %56, %cst_21 [1] : vector<40x20xf32> to vector<40xf32>
    %58 = vector.shape_cast %57 : vector<40xf32> to vector<40x1xf32>
    %cst_22 = arith.constant 2.000000e+01 : f32
    %59 = vector.broadcast %cst_22 : f32 to vector<40x1xf32>
    %60 = arith.divf %58, %59 : vector<40x1xf32>
    %61 = vector.broadcast %60 : vector<40x1xf32> to vector<40x20xf32>
    %62 = arith.subf %56, %61 : vector<40x20xf32>
    %63 = arith.mulf %62, %62 : vector<40x20xf32>
    %cst_23 = arith.constant dense<0.000000e+00> : vector<40xf32>
    %64 = vector.multi_reduction <add>, %63, %cst_23 [1] : vector<40x20xf32> to vector<40xf32>
    %65 = vector.shape_cast %64 : vector<40xf32> to vector<40x1xf32>
    %cst_24 = arith.constant 2.000000e+01 : f32
    %66 = vector.broadcast %cst_24 : f32 to vector<40x1xf32>
    %67 = arith.divf %65, %66 : vector<40x1xf32>
    %68 = vector.broadcast %60 : vector<40x1xf32> to vector<40x20xf32>
    %69 = arith.subf %56, %68 : vector<40x20xf32>
    %cst_25 = arith.constant 9.99999974E-6 : f32
    %70 = vector.broadcast %cst_25 : f32 to vector<40x1xf32>
    %71 = arith.addf %67, %70 : vector<40x1xf32>
    %72 = math.sqrt %71 : vector<40x1xf32>
    %73 = vector.broadcast %72 : vector<40x1xf32> to vector<40x20xf32>
    %74 = arith.divf %69, %73 : vector<40x20xf32>
    %75 = vector.extract_strided_slice %52 {offsets = [1, 0], sizes = [1, 20], strides = [1, 1]} : vector<3x20xf32> to vector<1x20xf32>
    %76 = vector.broadcast %75 : vector<1x20xf32> to vector<40x20xf32>
    %77 = arith.mulf %74, %76 : vector<40x20xf32>
    %78 = vector.extract_strided_slice %52 {offsets = [2, 0], sizes = [1, 20], strides = [1, 1]} : vector<3x20xf32> to vector<1x20xf32>
    %79 = vector.broadcast %78 : vector<1x20xf32> to vector<40x20xf32>
    %80 = arith.addf %77, %79 : vector<40x20xf32>
    %c0_26 = arith.constant 0 : index
    %c0_27 = arith.constant 0 : index
    %81 = vector.load %arg7[%c0_26, %c0_27] : memref<40x20xf32, #tpu.memory_space<vmem>>, vector<40x20xf32>
    tpu.vector_store %arg7[%c0_26, %c0_27], %80 {strides = array<i32>} : memref<40x20xf32, #tpu.memory_space<vmem>>, vector<40x20xf32>,
    return
  }
}

</mosaic_0001>

<llo_original>
// kernel: tpu_custom_call.1
$region0: #{tpu_custom_call.1}
  #allocation0 [shape = 'u32[]', space=smem, size = 0x4, offset = 0x4, fixed_abs, tag = 'smem constant byte address 0x4 - core index']
  #allocation1 [shape = 'u32[144,128]{1,0:T(1,128)}', space=vmem, size = 0x12000, scoped, tag = 'internal scratch']
  %s0 = inlined_call_operand.vmem [shape: f32[40,20], index: 0, kind: input, shape index: {}]
  %s1 = inlined_call_operand.vmem [shape: f32[64,20], index: 1, kind: input, shape index: {}]
  %s2 = inlined_call_operand.vmem [shape: f32[64,20], index: 2, kind: input, shape index: {}]
  %s3 = inlined_call_operand.vmem [shape: f32[20,30], index: 3, kind: input, shape index: {}]
  %s4 = inlined_call_operand.vmem [shape: f32[1,30], index: 4, kind: input, shape index: {}]
  %s5 = inlined_call_operand.vmem [shape: f32[10,20], index: 5, kind: input, shape index: {}]
  %s6 = inlined_call_operand.vmem [shape: f32[3,20], index: 6, kind: input, shape index: {}]
  %s7 = inlined_call_operand.vmem [shape: f32[40,20], index: 7, kind: output, shape index: {}]
  %s8 = sld [smem:[#allocation0]]
  $region38: #{tpu_custom_call.1} parent=0
    _
  %s10 = ssub.s32 1, %s8
  %s11 = scalar_select 0, %s10, %s8
  // Predicated region
  $region2: #{tpu_custom_call.1} parent=0 // pred_check
    _
  $region3: #{tpu_custom_call.1} parent=0 // pred_check_branch
    %13 = sbr.rel (0) target = $region5
  $region4: #{tpu_custom_call.1} parent=0 // pred_region
    _
  $region5: #{tpu_custom_call.1} parent=0 // pred_fallthru
    _
  // Predicated region
  $region6: #{tpu_custom_call.1} parent=0 // pred_check
    _
  $region7: #{tpu_custom_call.1} parent=0 // pred_check_branch
    %15 = sbr.rel (0) target = $region9
  $region8: #{tpu_custom_call.1} parent=0 // pred_region
    _
  $region9: #{tpu_custom_call.1} parent=0 // pred_fallthru
    _
  // Predicated region
  $region10: #{tpu_custom_call.1} parent=0 // pred_check
    _
  $region11: #{tpu_custom_call.1} parent=0 // pred_check_branch
    %17 = sbr.rel (0) target = $region13
  $region12: #{tpu_custom_call.1} parent=0 // pred_region
    _
  $region13: #{tpu_custom_call.1} parent=0 // pred_fallthru
    _
  // Predicated region
  $region14: #{tpu_custom_call.1} parent=0 // pred_check
    _
  $region15: #{tpu_custom_call.1} parent=0 // pred_check_branch
    %19 = sbr.rel (0) target = $region17
  $region16: #{tpu_custom_call.1} parent=0 // pred_region
    _
  $region17: #{tpu_custom_call.1} parent=0 // pred_fallthru
    _
  // Predicated region
  $region18: #{tpu_custom_call.1} parent=0 // pred_check
    _
  $region19: #{tpu_custom_call.1} parent=0 // pred_check_branch
    %21 = sbr.rel (0) target = $region21
  $region20: #{tpu_custom_call.1} parent=0 // pred_region
    _
  $region21: #{tpu_custom_call.1} parent=0 // pred_fallthru
    _
  // Predicated region
  $region22: #{tpu_custom_call.1} parent=0 // pred_check
    _
  $region23: #{tpu_custom_call.1} parent=0 // pred_check_branch
    %23 = sbr.rel (0) target = $region25
  $region24: #{tpu_custom_call.1} parent=0 // pred_region
    _
  $region25: #{tpu_custom_call.1} parent=0 // pred_fallthru
    _
  // Predicated region
  $region26: #{tpu_custom_call.1} parent=0 // pred_check
    _
  $region27: #{tpu_custom_call.1} parent=0 // pred_check_branch
    %25 = sbr.rel (0) target = $region29
  $region28: #{tpu_custom_call.1} parent=0 // pred_region
    _
  $region29: #{tpu_custom_call.1} parent=0 // pred_fallthru
    _
  %v26 = vld [vmem:[%s0] sm:$0xff]
  %v27 = vld [vmem:[%s0 + $0x8] sm:$0xff]
  %v28 = vld [vmem:[%s0 + $0x10] sm:$0xff]
  %v29 = vld [vmem:[%s0 + $0x18] sm:$0xff]
  %v30 = vld [vmem:[%s0 + $0x20] sm:$0xff]
  %v31 = vld [vmem:[%s1] sm:$0xff]
  %v32 = vld [vmem:[%s1 + $0x8] sm:$0xff]
  %v33 = vld [vmem:[%s1 + $0x10] sm:$0xff]
  %v34 = vld [vmem:[%s1 + $0x18] sm:$0xff]
  %v35 = vld [vmem:[%s1 + $0x20] sm:$0xff]
  %v36 = vld [vmem:[%s1 + $0x28] sm:$0xff]
  %v37 = vld [vmem:[%s1 + $0x30] sm:$0xff]
  %v38 = vld [vmem:[%s1 + $0x38] sm:$0xff]
  %v39 = vld [vmem:[%s2] sm:$0xff]
  %v40 = vld [vmem:[%s2 + $0x8] sm:$0xff]
  %v41 = vld [vmem:[%s2 + $0x10] sm:$0xff]
  %v42 = vld [vmem:[%s2 + $0x18] sm:$0xff]
  %v43 = vld [vmem:[%s2 + $0x20] sm:$0xff]
  %v44 = vld [vmem:[%s2 + $0x28] sm:$0xff]
  %v45 = vld [vmem:[%s2 + $0x30] sm:$0xff]
  %v46 = vld [vmem:[%s2 + $0x38] sm:$0xff]
  %v47 = vld [vmem:[%s3] sm:$0xff]
  %v48 = vld [vmem:[%s3 + $0x8] sm:$0xff]
  %v49 = vld [vmem:[%s3 + $0x10] sm:$0xf]
  %v50 = vld [vmem:[%s4] sm:$0x1]
  %v52 = vlaneseq
  %v53 = vshrl.u32 %v52, 7
  %v54 = vsub.s32 0, %v53
  %v55 = vrot.slane %v50, %v54
  %vm57 = vcmask 162816
  %v59 = vsel %vm57, %v26, 0
  %v62 = vsel %vm57, %v27, 0
  %v65 = vsel %vm57, %v28, 0
  %v68 = vsel %vm57, %v29, 0
  %v71 = vsel %vm57, %v30, 0
  %vm73 = vcmask 1043456
  %v75 = vsel %vm73, %v49, 0
  %77 = vmatprep.subr.mxu0 0.0
  %78 = vmatpush1.msra.mxu0 %v47
  %79 = vmatprep.subr.mxu0 0.0
  %80 = vmatpush1.msra.mxu0 %v48
  %81 = vmatprep.subr.mxu0 0.0
  %82 = vmatpush1.msra.mxu0 %v75
  %83 = vmatprep.subr.mxu0 0.0
  %84 = vmatpush1.msra.mxu0 0.0
  %85 = vmatprep.subr.mxu0 0.0
  %86 = vmatpush1.msra.mxu0 0.0
  %87 = vmatprep.subr.mxu0 0.0
  %88 = vmatpush1.msra.mxu0 0.0
  %89 = vmatprep.subr.mxu0 0.0
  %90 = vmatpush1.msra.mxu0 0.0
  %91 = vmatprep.subr.mxu0 0.0
  %92 = vmatpush1.msra.mxu0 0.0
  %93 = vmatprep.subr.mxu0 0.0
  %94 = vmatpush1.msra.mxu0 0.0
  %95 = vmatprep.subr.mxu0 0.0
  %96 = vmatpush1.msra.mxu0 0.0
  %97 = vmatprep.subr.mxu0 0.0
  %98 = vmatpush1.msra.mxu0 0.0
  %99 = vmatprep.subr.mxu0 0.0
  %100 = vmatpush1.msra.mxu0 0.0
  %101 = vmatprep.subr.mxu0 0.0
  %102 = vmatpush1.msra.mxu0 0.0
  %103 = vmatprep.subr.mxu0 0.0
  %104 = vmatpush1.msra.mxu0 0.0
  %105 = vmatprep.subr.mxu0 0.0
  %106 = vmatpush1.msra.mxu0 0.0
  %107 = vmatprep.subr.mxu0 0.0
  %108 = vmatpush1.msra.mxu0 0.0
  %109 = vmatprep.subr.mxu0 0.0
  %110 = vmatpush1.msra.mxu0 0.0
  %111 = vmatprep.subr.mxu0 0.0
  %112 = vmatpush1.msra.mxu0 0.0
  %113 = vmatprep.subr.mxu0 0.0
  %114 = vmatpush1.msra.mxu0 0.0
  %115 = vmatprep.subr.mxu0 0.0
  %116 = vmatpush1.msra.mxu0 0.0
  %117 = vmatprep.subr.mxu0 0.0
  %118 = vmatpush1.msra.mxu0 0.0
  %119 = vmatprep.subr.mxu0 0.0
  %120 = vmatpush1.msra.mxu0 0.0
  %121 = vmatprep.subr.mxu0 0.0
  %122 = vmatpush1.msra.mxu0 0.0
  %123 = vmatprep.subr.mxu0 0.0
  %124 = vmatpush1.msra.mxu0 0.0
  %125 = vmatprep.subr.mxu0 0.0
  %126 = vmatpush1.msra.mxu0 0.0
  %127 = vmatprep.subr.mxu0 0.0
  %128 = vmatpush1.msra.mxu0 0.0
  %129 = vmatprep.subr.mxu0 0.0
  %130 = vmatpush1.msra.mxu0 0.0
  %131 = vmatprep.subr.mxu0 0.0
  %132 = vmatpush1.msra.mxu0 0.0
  %133 = vmatprep.subr.mxu0 0.0
  %134 = vmatpush1.msra.mxu0 0.0
  %135 = vmatprep.subr.mxu0 0.0
  %136 = vmatpush1.msra.mxu0 0.0
  %137 = vmatprep.subr.mxu0 0.0
  %138 = vmatpush1.msra.mxu0 0.0
  %139 = vmatprep.subr.mxu0 0.0
  %140 = vmatpush1.msra.mxu0 0.0
  %141 = vmatprep.mubr.f32.mxu0 0.0
  %142 = vmatmul.mubr.f32.gmra.mrb[0].mxu0 %v59
  %v143 = vpop.f32.mrb[0].mxu0
  %v144 = vadd.f32 %v55, %v143
  %v145 = vpop.f32.mrb[0].mxu0
  %146 = vmatprep.mubr.f32.mxu0 0.0
  %147 = vmatmul.mubr.f32.gmra.mrb[0].mxu0 %v62
  %v148 = vpop.f32.mrb[0].mxu0
  %v149 = vadd.f32 %v55, %v148
  %v150 = vpop.f32.mrb[0].mxu0
  %151 = vmatprep.mubr.f32.mxu0 0.0
  %152 = vmatmul.mubr.f32.gmra.mrb[0].mxu0 %v65
  %v153 = vpop.f32.mrb[0].mxu0
  %v154 = vadd.f32 %v55, %v153
  %v155 = vpop.f32.mrb[0].mxu0
  %156 = vmatprep.mubr.f32.mxu0 0.0
  %157 = vmatmul.mubr.f32.gmra.mrb[0].mxu0 %v68
  %v158 = vpop.f32.mrb[0].mxu0
  %v159 = vadd.f32 %v55, %v158
  %v160 = vpop.f32.mrb[0].mxu0
  %161 = vmatprep.mubr.f32.mxu0 0.0
  %162 = vmatmul.mubr.f32.gmra.mrb[0].mxu0 %v71
  %v163 = vpop.f32.mrb[0].mxu0
  %v164 = vadd.f32 %v55, %v163
  %v165 = vpop.f32.mrb[0].mxu0
  %166 = vdwg.mxu0
  %169 = vrot.lane.b32.xlu0 %v47, 118
  %v170 = vpop.permute.xlu0 %169
  %171 = vrot.lane.b32.xlu0 %v48, 118
  %v172 = vpop.permute.xlu0 %171
  %173 = vrot.lane.b32.xlu0 %v49, 118
  %v174 = vpop.permute.xlu0 %173
  %177 = vrot.lane.b32.xlu0 %v55, 118
  %v178 = vpop.permute.xlu0 %177
  %v181 = vsel %vm57, %v31, 0
  %v184 = vsel %vm57, %v32, 0
  %v187 = vsel %vm57, %v33, 0
  %v190 = vsel %vm57, %v34, 0
  %v193 = vsel %vm57, %v35, 0
  %v196 = vsel %vm57, %v36, 0
  %v199 = vsel %vm57, %v37, 0
  %v202 = vsel %vm57, %v38, 0
  %v204 = vsel %vm73, %v174, 0
  %206 = vmatprep.subr.mxu0 0.0
  %207 = vmatpush1.msra.mxu0 %v170
  %208 = vmatprep.subr.mxu0 0.0
  %209 = vmatpush1.msra.mxu0 %v172
  %210 = vmatprep.subr.mxu0 0.0
  %211 = vmatpush1.msra.mxu0 %v204
  %212 = vmatprep.subr.mxu0 0.0
  %213 = vmatpush1.msra.mxu0 0.0
  %214 = vmatprep.subr.mxu0 0.0
  %215 = vmatpush1.msra.mxu0 0.0
  %216 = vmatprep.subr.mxu0 0.0
  %217 = vmatpush1.msra.mxu0 0.0
  %218 = vmatprep.subr.mxu0 0.0
  %219 = vmatpush1.msra.mxu0 0.0
  %220 = vmatprep.subr.mxu0 0.0
  %221 = vmatpush1.msra.mxu0 0.0
  %222 = vmatprep.subr.mxu0 0.0
  %223 = vmatpush1.msra.mxu0 0.0
  %224 = vmatprep.subr.mxu0 0.0
  %225 = vmatpush1.msra.mxu0 0.0
  %226 = vmatprep.subr.mxu0 0.0
  %227 = vmatpush1.msra.mxu0 0.0
  %228 = vmatprep.subr.mxu0 0.0
  %229 = vmatpush1.msra.mxu0 0.0
  %230 = vmatprep.subr.mxu0 0.0
  %231 = vmatpush1.msra.mxu0 0.0
  %232 = vmatprep.subr.mxu0 0.0
  %233 = vmatpush1.msra.mxu0 0.0
  %234 = vmatprep.subr.mxu0 0.0
  %235 = vmatpush1.msra.mxu0 0.0
  %236 = vmatprep.subr.mxu0 0.0
  %237 = vmatpush1.msra.mxu0 0.0
  %238 = vmatprep.subr.mxu0 0.0
  %239 = vmatpush1.msra.mxu0 0.0
  %240 = vmatprep.subr.mxu0 0.0
  %241 = vmatpush1.msra.mxu0 0.0
  %242 = vmatprep.subr.mxu0 0.0
  %243 = vmatpush1.msra.mxu0 0.0
  %244 = vmatprep.subr.mxu0 0.0
  %245 = vmatpush1.msra.mxu0 0.0
  %246 = vmatprep.subr.mxu0 0.0
  %247 = vmatpush1.msra.mxu0 0.0
  %248 = vmatprep.subr.mxu0 0.0
  %249 = vmatpush1.msra.mxu0 0.0
  %250 = vmatprep.subr.mxu0 0.0
  %251 = vmatpush1.msra.mxu0 0.0
  %252 = vmatprep.subr.mxu0 0.0
  %253 = vmatpush1.msra.mxu0 0.0
  %254 = vmatprep.subr.mxu0 0.0
  %255 = vmatpush1.msra.mxu0 0.0
  %256 = vmatprep.subr.mxu0 0.0
  %257 = vmatpush1.msra.mxu0 0.0
  %258 = vmatprep.subr.mxu0 0.0
  %259 = vmatpush1.msra.mxu0 0.0
  %260 = vmatprep.subr.mxu0 0.0
  %261 = vmatpush1.msra.mxu0 0.0
  %262 = vmatprep.subr.mxu0 0.0
  %263 = vmatpush1.msra.mxu0 0.0
  %264 = vmatprep.subr.mxu0 0.0
  %265 = vmatpush1.msra.mxu0 0.0
  %266 = vmatprep.subr.mxu0 0.0
  %267 = vmatpush1.msra.mxu0 0.0
  %268 = vmatprep.subr.mxu0 0.0
  %269 = vmatpush1.msra.mxu0 0.0
  %270 = vmatprep.mubr.f32.mxu0 0.0
  %271 = vmatmul.mubr.f32.gmra.mrb[0].mxu0 %v181
  %v272 = vpop.f32.mrb[0].mxu0
  %v273 = vadd.f32 %v178, %v272
  %v274 = vpop.f32.mrb[0].mxu0
  %275 = vmatprep.mubr.f32.mxu0 0.0
  %276 = vmatmul.mubr.f32.gmra.mrb[0].mxu0 %v184
  %v277 = vpop.f32.mrb[0].mxu0
  %v278 = vadd.f32 %v178, %v277
  %v279 = vpop.f32.mrb[0].mxu0
  %280 = vmatprep.mubr.f32.mxu0 0.0
  %281 = vmatmul.mubr.f32.gmra.mrb[0].mxu0 %v187
  %v282 = vpop.f32.mrb[0].mxu0
  %v283 = vadd.f32 %v178, %v282
  %v284 = vpop.f32.mrb[0].mxu0
  %285 = vmatprep.mubr.f32.mxu0 0.0
  %286 = vmatmul.mubr.f32.gmra.mrb[0].mxu0 %v190
  %v287 = vpop.f32.mrb[0].mxu0
  %v288 = vadd.f32 %v178, %v287
  %v289 = vpop.f32.mrb[0].mxu0
  %290 = vmatprep.mubr.f32.mxu0 0.0
  %291 = vmatmul.mubr.f32.gmra.mrb[0].mxu0 %v193
  %v292 = vpop.f32.mrb[0].mxu0
  %v293 = vadd.f32 %v178, %v292
  %v294 = vpop.f32.mrb[0].mxu0
  %295 = vmatprep.mubr.f32.mxu0 0.0
  %296 = vmatmul.mubr.f32.gmra.mrb[0].mxu0 %v196
  %v297 = vpop.f32.mrb[0].mxu0
  %v298 = vadd.f32 %v178, %v297
  %v299 = vpop.f32.mrb[0].mxu0
  %300 = vmatprep.mubr.f32.mxu0 0.0
  %301 = vmatmul.mubr.f32.gmra.mrb[0].mxu0 %v199
  %v302 = vpop.f32.mrb[0].mxu0
  %v303 = vadd.f32 %v178, %v302
  %v304 = vpop.f32.mrb[0].mxu0
  %305 = vmatprep.mubr.f32.mxu0 0.0
  %306 = vmatmul.mubr.f32.gmra.mrb[0].mxu0 %v202
  %v307 = vpop.f32.mrb[0].mxu0
  %v308 = vadd.f32 %v178, %v307
  %v309 = vpop.f32.mrb[0].mxu0
  %310 = vdwg.mxu0
  %311 = vrot.lane.b32.xlu0 %v47, 108
  %v312 = vpop.permute.xlu0 %311
  %313 = vrot.lane.b32.xlu0 %v48, 108
  %v314 = vpop.permute.xlu0 %313
  %315 = vrot.lane.b32.xlu0 %v49, 108
  %v316 = vpop.permute.xlu0 %315
  %319 = vrot.lane.b32.xlu0 %v55, 108
  %v320 = vpop.permute.xlu0 %319
  %v323 = vsel %vm57, %v39, 0
  %v326 = vsel %vm57, %v40, 0
  %v329 = vsel %vm57, %v41, 0
  %v332 = vsel %vm57, %v42, 0
  %v335 = vsel %vm57, %v43, 0
  %v338 = vsel %vm57, %v44, 0
  %v341 = vsel %vm57, %v45, 0
  %v344 = vsel %vm57, %v46, 0
  %v346 = vsel %vm73, %v316, 0
  %348 = vmatprep.subr.mxu0 0.0
  %349 = vmatpush1.msra.mxu0 %v312
  %350 = vmatprep.subr.mxu0 0.0
  %351 = vmatpush1.msra.mxu0 %v314
  %352 = vmatprep.subr.mxu0 0.0
  %353 = vmatpush1.msra.mxu0 %v346
  %354 = vmatprep.subr.mxu0 0.0
  %355 = vmatpush1.msra.mxu0 0.0
  %356 = vmatprep.subr.mxu0 0.0
  %357 = vmatpush1.msra.mxu0 0.0
  %358 = vmatprep.subr.mxu0 0.0
  %359 = vmatpush1.msra.mxu0 0.0
  %360 = vmatprep.subr.mxu0 0.0
  %361 = vmatpush1.msra.mxu0 0.0
  %362 = vmatprep.subr.mxu0 0.0
  %363 = vmatpush1.msra.mxu0 0.0
  %364 = vmatprep.subr.mxu0 0.0
  %365 = vmatpush1.msra.mxu0 0.0
  %366 = vmatprep.subr.mxu0 0.0
  %367 = vmatpush1.msra.mxu0 0.0
  %368 = vmatprep.subr.mxu0 0.0
  %369 = vmatpush1.msra.mxu0 0.0
  %370 = vmatprep.subr.mxu0 0.0
  %371 = vmatpush1.msra.mxu0 0.0
  %372 = vmatprep.subr.mxu0 0.0
  %373 = vmatpush1.msra.mxu0 0.0
  %374 = vmatprep.subr.mxu0 0.0
  %375 = vmatpush1.msra.mxu0 0.0
  %376 = vmatprep.subr.mxu0 0.0
  %377 = vmatpush1.msra.mxu0 0.0
  %378 = vmatprep.subr.mxu0 0.0
  %379 = vmatpush1.msra.mxu0 0.0
  %380 = vmatprep.subr.mxu0 0.0
  %381 = vmatpush1.msra.mxu0 0.0
  %382 = vmatprep.subr.mxu0 0.0
  %383 = vmatpush1.msra.mxu0 0.0
  %384 = vmatprep.subr.mxu0 0.0
  %385 = vmatpush1.msra.mxu0 0.0
  %386 = vmatprep.subr.mxu0 0.0
  %387 = vmatpush1.msra.mxu0 0.0
  %388 = vmatprep.subr.mxu0 0.0
  %389 = vmatpush1.msra.mxu0 0.0
  %390 = vmatprep.subr.mxu0 0.0
  %391 = vmatpush1.msra.mxu0 0.0
  %392 = vmatprep.subr.mxu0 0.0
  %393 = vmatpush1.msra.mxu0 0.0
  %394 = vmatprep.subr.mxu0 0.0
  %395 = vmatpush1.msra.mxu0 0.0
  %396 = vmatprep.subr.mxu0 0.0
  %397 = vmatpush1.msra.mxu0 0.0
  %398 = vmatprep.subr.mxu0 0.0
  %399 = vmatpush1.msra.mxu0 0.0
  %400 = vmatprep.subr.mxu0 0.0
  %401 = vmatpush1.msra.mxu0 0.0
  %402 = vmatprep.subr.mxu0 0.0
  %403 = vmatpush1.msra.mxu0 0.0
  %404 = vmatprep.subr.mxu0 0.0
  %405 = vmatpush1.msra.mxu0 0.0
  %406 = vmatprep.subr.mxu0 0.0
  %407 = vmatpush1.msra.mxu0 0.0
  %408 = vmatprep.subr.mxu0 0.0
  %409 = vmatpush1.msra.mxu0 0.0
  %410 = vmatprep.subr.mxu0 0.0
  %411 = vmatpush1.msra.mxu0 0.0
  %412 = vmatprep.mubr.f32.mxu0 0.0
  %413 = vmatmul.mubr.f32.gmra.mrb[0].mxu0 %v323
  %v414 = vpop.f32.mrb[0].mxu0
  %v415 = vadd.f32 %v320, %v414
  %v416 = vpop.f32.mrb[0].mxu0
  %417 = vmatprep.mubr.f32.mxu0 0.0
  %418 = vmatmul.mubr.f32.gmra.mrb[0].mxu0 %v326
  %v419 = vpop.f32.mrb[0].mxu0
  %v420 = vadd.f32 %v320, %v419
  %v421 = vpop.f32.mrb[0].mxu0
  %422 = vmatprep.mubr.f32.mxu0 0.0
  %423 = vmatmul.mubr.f32.gmra.mrb[0].mxu0 %v329
  %v424 = vpop.f32.mrb[0].mxu0
  %v425 = vadd.f32 %v320, %v424
  %v426 = vpop.f32.mrb[0].mxu0
  %427 = vmatprep.mubr.f32.mxu0 0.0
  %428 = vmatmul.mubr.f32.gmra.mrb[0].mxu0 %v332
  %v429 = vpop.f32.mrb[0].mxu0
  %v430 = vadd.f32 %v320, %v429
  %v431 = vpop.f32.mrb[0].mxu0
  %432 = vmatprep.mubr.f32.mxu0 0.0
  %433 = vmatmul.mubr.f32.gmra.mrb[0].mxu0 %v335
  %v434 = vpop.f32.mrb[0].mxu0
  %v435 = vadd.f32 %v320, %v434
  %v436 = vpop.f32.mrb[0].mxu0
  %437 = vmatprep.mubr.f32.mxu0 0.0
  %438 = vmatmul.mubr.f32.gmra.mrb[0].mxu0 %v338
  %v439 = vpop.f32.mrb[0].mxu0
  %v440 = vadd.f32 %v320, %v439
  %v441 = vpop.f32.mrb[0].mxu0
  %442 = vmatprep.mubr.f32.mxu0 0.0
  %443 = vmatmul.mubr.f32.gmra.mrb[0].mxu0 %v341
  %v444 = vpop.f32.mrb[0].mxu0
  %v445 = vadd.f32 %v320, %v444
  %v446 = vpop.f32.mrb[0].mxu0
  %447 = vmatprep.mubr.f32.mxu0 0.0
  %448 = vmatmul.mubr.f32.gmra.mrb[0].mxu0 %v344
  %v449 = vpop.f32.mrb[0].mxu0
  %v450 = vadd.f32 %v320, %v449
  %v451 = vpop.f32.mrb[0].mxu0
  %452 = vdwg.mxu0
  %v458 = vcombine.high %v144, %v144
  %v460 = vunpack.c.l.s4 1983009808
  %v461 = vunpack.c.0.s8 %v460
  %v462 = vlaneseq
  %v463 = vshrl.u32 %v462, 7
  %v464 = vsub.s32 %v461, %v463
  %v465 = vrot.slane %v144, %v464
  %v467 = vunpack.c.l.s4 1983009808
  %v468 = vunpack.c.0.s8 %v467
  %v469 = vlaneseq
  %v470 = vshrl.u32 %v469, 7
  %v471 = vsub.s32 %v468, %v470
  %v472 = vrot.slane %v458, %v471
  %v473 = vcombine.high %v465, %v465
  %v474 = vcombine.high %v472, %v472
  %v475 = vcombine.high %v149, %v149
  %v477 = vunpack.c.l.s4 1983009808
  %v478 = vunpack.c.0.s8 %v477
  %v479 = vlaneseq
  %v480 = vshrl.u32 %v479, 7
  %v481 = vsub.s32 %v478, %v480
  %v482 = vrot.slane %v149, %v481
  %v484 = vunpack.c.l.s4 1983009808
  %v485 = vunpack.c.0.s8 %v484
  %v486 = vlaneseq
  %v487 = vshrl.u32 %v486, 7
  %v488 = vsub.s32 %v485, %v487
  %v489 = vrot.slane %v475, %v488
  %v490 = vcombine.high %v482, %v482
  %v491 = vcombine.high %v489, %v489
  %v492 = vcombine.high %v154, %v154
  %v494 = vunpack.c.l.s4 1983009808
  %v495 = vunpack.c.0.s8 %v494
  %v496 = vlaneseq
  %v497 = vshrl.u32 %v496, 7
  %v498 = vsub.s32 %v495, %v497
  %v499 = vrot.slane %v154, %v498
  %v501 = vunpack.c.l.s4 1983009808
  %v502 = vunpack.c.0.s8 %v501
  %v503 = vlaneseq
  %v504 = vshrl.u32 %v503, 7
  %v505 = vsub.s32 %v502, %v504
  %v506 = vrot.slane %v492, %v505
  %v507 = vcombine.high %v499, %v499
  %v508 = vcombine.high %v506, %v506
  %v509 = vcombine.high %v159, %v159
  %v511 = vunpack.c.l.s4 1983009808
  %v512 = vunpack.c.0.s8 %v511
  %v513 = vlaneseq
  %v514 = vshrl.u32 %v513, 7
  %v515 = vsub.s32 %v512, %v514
  %v516 = vrot.slane %v159, %v515
  %v518 = vunpack.c.l.s4 1983009808
  %v519 = vunpack.c.0.s8 %v518
  %v520 = vlaneseq
  %v521 = vshrl.u32 %v520, 7
  %v522 = vsub.s32 %v519, %v521
  %v523 = vrot.slane %v509, %v522
  %v524 = vcombine.high %v516, %v516
  %v525 = vcombine.high %v523, %v523
  %v526 = vcombine.high %v164, %v164
  %v528 = vunpack.c.l.s4 1983009808
  %v529 = vunpack.c.0.s8 %v528
  %v530 = vlaneseq
  %v531 = vshrl.u32 %v530, 7
  %v532 = vsub.s32 %v529, %v531
  %v533 = vrot.slane %v164, %v532
  %v535 = vunpack.c.l.s4 1983009808
  %v536 = vunpack.c.0.s8 %v535
  %v537 = vlaneseq
  %v538 = vshrl.u32 %v537, 7
  %v539 = vsub.s32 %v536, %v538
  %v540 = vrot.slane %v526, %v539
  %v541 = vcombine.high %v533, %v533
  %v542 = vcombine.high %v540, %v540
  %543 = vrot.lane.b32.xlu0 %v465, 123
  %v544 = vpop.permute.xlu0 %543
  %545 = vrot.lane.b32.xlu0 %v473, 123
  %v546 = vpop.permute.xlu0 %545
  %547 = vrot.lane.b32.xlu0 %v472, 123
  %v548 = vpop.permute.xlu0 %547
  %549 = vrot.lane.b32.xlu0 %v474, 123
  %v550 = vpop.permute.xlu0 %549
  %551 = vrot.lane.b32.xlu0 %v482, 123
  %v552 = vpop.permute.xlu0 %551
  %553 = vrot.lane.b32.xlu0 %v490, 123
  %v554 = vpop.permute.xlu0 %553
  %555 = vrot.lane.b32.xlu0 %v489, 123
  %v556 = vpop.permute.xlu0 %555
  %557 = vrot.lane.b32.xlu0 %v491, 123
  %v558 = vpop.permute.xlu0 %557
  %559 = vrot.lane.b32.xlu0 %v499, 123
  %v560 = vpop.permute.xlu0 %559
  %561 = vrot.lane.b32.xlu0 %v507, 123
  %v562 = vpop.permute.xlu0 %561
  %563 = vrot.lane.b32.xlu0 %v506, 123
  %v564 = vpop.permute.xlu0 %563
  %565 = vrot.lane.b32.xlu0 %v508, 123
  %v566 = vpop.permute.xlu0 %565
  %567 = vrot.lane.b32.xlu0 %v516, 123
  %v568 = vpop.permute.xlu0 %567
  %569 = vrot.lane.b32.xlu0 %v524, 123
  %v570 = vpop.permute.xlu0 %569
  %571 = vrot.lane.b32.xlu0 %v523, 123
  %v572 = vpop.permute.xlu0 %571
  %573 = vrot.lane.b32.xlu0 %v525, 123
  %v574 = vpop.permute.xlu0 %573
  %575 = vrot.lane.b32.xlu0 %v533, 123
  %v576 = vpop.permute.xlu0 %575
  %577 = vrot.lane.b32.xlu0 %v541, 123
  %v578 = vpop.permute.xlu0 %577
  %579 = vrot.lane.b32.xlu0 %v540, 123
  %v580 = vpop.permute.xlu0 %579
  %581 = vrot.lane.b32.xlu0 %v542, 123
  %v582 = vpop.permute.xlu0 %581
  %591 = vrot.lane.b32.xlu0 %v273, 123
  %v592 = vpop.permute.xlu0 %591
  %593 = vrot.lane.b32.xlu0 %v278, 123
  %v594 = vpop.permute.xlu0 %593
  %595 = vrot.lane.b32.xlu0 %v283, 123
  %v596 = vpop.permute.xlu0 %595
  %597 = vrot.lane.b32.xlu0 %v288, 123
  %v598 = vpop.permute.xlu0 %597
  %599 = vrot.lane.b32.xlu0 %v293, 123
  %v600 = vpop.permute.xlu0 %599
  %601 = vrot.lane.b32.xlu0 %v298, 123
  %v602 = vpop.permute.xlu0 %601
  %603 = vrot.lane.b32.xlu0 %v303, 123
  %v604 = vpop.permute.xlu0 %603
  %605 = vrot.lane.b32.xlu0 %v308, 123
  %v606 = vpop.permute.xlu0 %605
  %615 = vrot.lane.b32.xlu0 %v415, 123
  %v616 = vpop.permute.xlu0 %615
  %617 = vrot.lane.b32.xlu0 %v420, 123
  %v618 = vpop.permute.xlu0 %617
  %619 = vrot.lane.b32.xlu0 %v425, 123
  %v620 = vpop.permute.xlu0 %619
  %621 = vrot.lane.b32.xlu0 %v430, 123
  %v622 = vpop.permute.xlu0 %621
  %623 = vrot.lane.b32.xlu0 %v435, 123
  %v624 = vpop.permute.xlu0 %623
  %625 = vrot.lane.b32.xlu0 %v440, 123
  %v626 = vpop.permute.xlu0 %625
  %627 = vrot.lane.b32.xlu0 %v445, 123
  %v628 = vpop.permute.xlu0 %627
  %629 = vrot.lane.b32.xlu0 %v450, 123
  %v630 = vpop.permute.xlu0 %629
  %v639 = vcombine.low %v465, %v473
  %v640 = vcombine.low %v472, %v474
  %v642 = vunpack.c.l.s4 1983009808
  %v643 = vunpack.c.0.s8 %v642
  %v644 = vlaneseq
  %v645 = vshrl.u32 %v644, 7
  %v646 = vsub.s32 %v643, %v645
  %v647 = vrot.slane %v639, %v646
  %v649 = vunpack.c.l.s4 1983009808
  %v650 = vunpack.c.0.s8 %v649
  %v651 = vlaneseq
  %v652 = vshrl.u32 %v651, 7
  %v653 = vsub.s32 %v650, %v652
  %v654 = vrot.slane %v640, %v653
  %v655 = vcombine.low %v647, %v654
  %v657 = vunpack.c.l.s4 1983009808
  %v658 = vunpack.c.0.s8 %v657
  %v659 = vlaneseq
  %v660 = vshrl.u32 %v659, 7
  %v661 = vsub.s32 %v658, %v660
  %v662 = vrot.slane %v482, %v661
  %vm663 = vcmask 39936
  %v664 = vsel %vm663, %v655, 0
  %v666 = vsel %vm663, %v662, 0
  %v668 = vsel %vm663, %v273, 0
  %v670 = vsel %vm663, %v278, 0
  %672 = vmatprep.subr.mxu0 0.0
  %673 = vmatpush1.xpose.msra.mxu0 %v668
  %674 = vmatprep.subr.mxu0 0.0
  %675 = vmatpush1.xpose.msra.mxu0 %v670
  %676 = vmatprep.subr.mxu0 0.0
  %677 = vmatpush1.xpose.msra.mxu0 0.0
  %678 = vmatprep.subr.mxu0 0.0
  %679 = vmatpush1.xpose.msra.mxu0 0.0
  %680 = vmatprep.subr.mxu0 0.0
  %681 = vmatpush1.xpose.msra.mxu0 0.0
  %682 = vmatprep.subr.mxu0 0.0
  %683 = vmatpush1.xpose.msra.mxu0 0.0
  %684 = vmatprep.subr.mxu0 0.0
  %685 = vmatpush1.xpose.msra.mxu0 0.0
  %686 = vmatprep.subr.mxu0 0.0
  %687 = vmatpush1.xpose.msra.mxu0 0.0
  %688 = vmatprep.subr.mxu0 0.0
  %689 = vmatpush1.xpose.msra.mxu0 0.0
  %690 = vmatprep.subr.mxu0 0.0
  %691 = vmatpush1.xpose.msra.mxu0 0.0
  %692 = vmatprep.subr.mxu0 0.0
  %693 = vmatpush1.xpose.msra.mxu0 0.0
  %694 = vmatprep.subr.mxu0 0.0
  %695 = vmatpush1.xpose.msra.mxu0 0.0
  %696 = vmatprep.subr.mxu0 0.0
  %697 = vmatpush1.xpose.msra.mxu0 0.0
  %698 = vmatprep.subr.mxu0 0.0
  %699 = vmatpush1.xpose.msra.mxu0 0.0
  %700 = vmatprep.subr.mxu0 0.0
  %701 = vmatpush1.xpose.msra.mxu0 0.0
  %702 = vmatprep.subr.mxu0 0.0
  %703 = vmatpush1.xpose.msra.mxu0 0.0
  %704 = vmatprep.subr.mxu0 0.0
  %705 = vmatpush1.xpose.msra.mxu0 0.0
  %706 = vmatprep.subr.mxu0 0.0
  %707 = vmatpush1.xpose.msra.mxu0 0.0
  %708 = vmatprep.subr.mxu0 0.0
  %709 = vmatpush1.xpose.msra.mxu0 0.0
  %710 = vmatprep.subr.mxu0 0.0
  %711 = vmatpush1.xpose.msra.mxu0 0.0
  %712 = vmatprep.subr.mxu0 0.0
  %713 = vmatpush1.xpose.msra.mxu0 0.0
  %714 = vmatprep.subr.mxu0 0.0
  %715 = vmatpush1.xpose.msra.mxu0 0.0
  %716 = vmatprep.subr.mxu0 0.0
  %717 = vmatpush1.xpose.msra.mxu0 0.0
  %718 = vmatprep.subr.mxu0 0.0
  %719 = vmatpush1.xpose.msra.mxu0 0.0
  %720 = vmatprep.subr.mxu0 0.0
  %721 = vmatpush1.xpose.msra.mxu0 0.0
  %722 = vmatprep.subr.mxu0 0.0
  %723 = vmatpush1.xpose.msra.mxu0 0.0
  %724 = vmatprep.subr.mxu0 0.0
  %725 = vmatpush1.xpose.msra.mxu0 0.0
  %726 = vmatprep.subr.mxu0 0.0
  %727 = vmatpush1.xpose.msra.mxu0 0.0
  %728 = vmatprep.subr.mxu0 0.0
  %729 = vmatpush1.xpose.msra.mxu0 0.0
  %730 = vmatprep.subr.mxu0 0.0
  %731 = vmatpush1.xpose.msra.mxu0 0.0
  %732 = vmatprep.subr.mxu0 0.0
  %733 = vmatpush1.xpose.msra.mxu0 0.0
  %734 = vmatprep.subr.mxu0 0.0
  %735 = vmatpush1.xpose.msra.mxu0 0.0
  %736 = vmatprep.mubr.f32.mxu0 0.0
  %737 = vmatmul.mubr.f32.gmra.mrb[0].mxu0 %v664
  %v738 = vpop.f32.mrb[0].mxu0
  %v739 = vadd.f32 0.0, %v738
  %v740 = vpop.f32.mrb[0].mxu0
  %741 = vmatprep.mubr.f32.mxu0 0.0
  %742 = vmatmul.mubr.f32.gmra.mrb[0].mxu0 %v666
  %v743 = vpop.f32.mrb[0].mxu0
  %v744 = vadd.f32 0.0, %v743
  %v745 = vpop.f32.mrb[0].mxu0
  %746 = vdwg.mxu0
  %v747 = vcombine.low %v490, %v489
  %v748 = vcombine.low %v491, %v499
  %v750 = vunpack.c.l.s4 1983009808
  %v751 = vunpack.c.0.s8 %v750
  %v752 = vlaneseq
  %v753 = vshrl.u32 %v752, 7
  %v754 = vsub.s32 %v751, %v753
  %v755 = vrot.slane %v747, %v754
  %v757 = vunpack.c.l.s4 1983009808
  %v758 = vunpack.c.0.s8 %v757
  %v759 = vlaneseq
  %v760 = vshrl.u32 %v759, 7
  %v761 = vsub.s32 %v758, %v760
  %v762 = vrot.slane %v748, %v761
  %v763 = vcombine.low %v755, %v762
  %v765 = vunpack.c.l.s4 1983009808
  %v766 = vunpack.c.0.s8 %v765
  %v767 = vlaneseq
  %v768 = vshrl.u32 %v767, 7
  %v769 = vsub.s32 %v766, %v768
  %v770 = vrot.slane %v507, %v769
  %v771 = vsel %vm663, %v763, 0
  %v773 = vsel %vm663, %v770, 0
  %v775 = vsel %vm663, %v283, 0
  %v777 = vsel %vm663, %v288, 0
  %779 = vmatprep.subr.mxu0 0.0
  %780 = vmatpush1.xpose.msra.mxu0 %v775
  %781 = vmatprep.subr.mxu0 0.0
  %782 = vmatpush1.xpose.msra.mxu0 %v777
  %783 = vmatprep.subr.mxu0 0.0
  %784 = vmatpush1.xpose.msra.mxu0 0.0
  %785 = vmatprep.subr.mxu0 0.0
  %786 = vmatpush1.xpose.msra.mxu0 0.0
  %787 = vmatprep.subr.mxu0 0.0
  %788 = vmatpush1.xpose.msra.mxu0 0.0
  %789 = vmatprep.subr.mxu0 0.0
  %790 = vmatpush1.xpose.msra.mxu0 0.0
  %791 = vmatprep.subr.mxu0 0.0
  %792 = vmatpush1.xpose.msra.mxu0 0.0
  %793 = vmatprep.subr.mxu0 0.0
  %794 = vmatpush1.xpose.msra.mxu0 0.0
  %795 = vmatprep.subr.mxu0 0.0
  %796 = vmatpush1.xpose.msra.mxu0 0.0
  %797 = vmatprep.subr.mxu0 0.0
  %798 = vmatpush1.xpose.msra.mxu0 0.0
  %799 = vmatprep.subr.mxu0 0.0
  %800 = vmatpush1.xpose.msra.mxu0 0.0
  %801 = vmatprep.subr.mxu0 0.0
  %802 = vmatpush1.xpose.msra.mxu0 0.0
  %803 = vmatprep.subr.mxu0 0.0
  %804 = vmatpush1.xpose.msra.mxu0 0.0
  %805 = vmatprep.subr.mxu0 0.0
  %806 = vmatpush1.xpose.msra.mxu0 0.0
  %807 = vmatprep.subr.mxu0 0.0
  %808 = vmatpush1.xpose.msra.mxu0 0.0
  %809 = vmatprep.subr.mxu0 0.0
  %810 = vmatpush1.xpose.msra.mxu0 0.0
  %811 = vmatprep.subr.mxu0 0.0
  %812 = vmatpush1.xpose.msra.mxu0 0.0
  %813 = vmatprep.subr.mxu0 0.0
  %814 = vmatpush1.xpose.msra.mxu0 0.0
  %815 = vmatprep.subr.mxu0 0.0
  %816 = vmatpush1.xpose.msra.mxu0 0.0
  %817 = vmatprep.subr.mxu0 0.0
  %818 = vmatpush1.xpose.msra.mxu0 0.0
  %819 = vmatprep.subr.mxu0 0.0
  %820 = vmatpush1.xpose.msra.mxu0 0.0
  %821 = vmatprep.subr.mxu0 0.0
  %822 = vmatpush1.xpose.msra.mxu0 0.0
  %823 = vmatprep.subr.mxu0 0.0
  %824 = vmatpush1.xpose.msra.mxu0 0.0
  %825 = vmatprep.subr.mxu0 0.0
  %826 = vmatpush1.xpose.msra.mxu0 0.0
  %827 = vmatprep.subr.mxu0 0.0
  %828 = vmatpush1.xpose.msra.mxu0 0.0
  %829 = vmatprep.subr.mxu0 0.0
  %830 = vmatpush1.xpose.msra.mxu0 0.0
  %831 = vmatprep.subr.mxu0 0.0
  %832 = vmatpush1.xpose.msra.mxu0 0.0
  %833 = vmatprep.subr.mxu0 0.0
  %834 = vmatpush1.xpose.msra.mxu0 0.0
  %835 = vmatprep.subr.mxu0 0.0
  %836 = vmatpush1.xpose.msra.mxu0 0.0
  %837 = vmatprep.subr.mxu0 0.0
  %838 = vmatpush1.xpose.msra.mxu0 0.0
  %839 = vmatprep.subr.mxu0 0.0
  %840 = vmatpush1.xpose.msra.mxu0 0.0
  %841 = vmatprep.subr.mxu0 0.0
  %842 = vmatpush1.xpose.msra.mxu0 0.0
  %843 = vmatprep.mubr.f32.mxu0 0.0
  %844 = vmatmul.mubr.f32.gmra.mrb[0].mxu0 %v771
  %v845 = vpop.f32.mrb[0].mxu0
  %v846 = vadd.f32 0.0, %v845
  %v847 = vpop.f32.mrb[0].mxu0
  %848 = vmatprep.mubr.f32.mxu0 0.0
  %849 = vmatmul.mubr.f32.gmra.mrb[0].mxu0 %v773
  %v850 = vpop.f32.mrb[0].mxu0
  %v851 = vadd.f32 0.0, %v850
  %v852 = vpop.f32.mrb[0].mxu0
  %853 = vdwg.mxu0
  %v854 = vcombine.low %v506, %v508
  %v855 = vcombine.low %v516, %v524
  %v857 = vunpack.c.l.s4 1983009808
  %v858 = vunpack.c.0.s8 %v857
  %v859 = vlaneseq
  %v860 = vshrl.u32 %v859, 7
  %v861 = vsub.s32 %v858, %v860
  %v862 = vrot.slane %v854, %v861
  %v864 = vunpack.c.l.s4 1983009808
  %v865 = vunpack.c.0.s8 %v864
  %v866 = vlaneseq
  %v867 = vshrl.u32 %v866, 7
  %v868 = vsub.s32 %v865, %v867
  %v869 = vrot.slane %v855, %v868
  %v870 = vcombine.low %v862, %v869
  %v872 = vunpack.c.l.s4 1983009808
  %v873 = vunpack.c.0.s8 %v872
  %v874 = vlaneseq
  %v875 = vshrl.u32 %v874, 7
  %v876 = vsub.s32 %v873, %v875
  %v877 = vrot.slane %v523, %v876
  %v878 = vsel %vm663, %v870, 0
  %v880 = vsel %vm663, %v877, 0
  %v882 = vsel %vm663, %v293, 0
  %v884 = vsel %vm663, %v298, 0
  %886 = vmatprep.subr.mxu0 0.0
  %887 = vmatpush1.xpose.msra.mxu0 %v882
  %888 = vmatprep.subr.mxu0 0.0
  %889 = vmatpush1.xpose.msra.mxu0 %v884
  %890 = vmatprep.subr.mxu0 0.0
  %891 = vmatpush1.xpose.msra.mxu0 0.0
  %892 = vmatprep.subr.mxu0 0.0
  %893 = vmatpush1.xpose.msra.mxu0 0.0
  %894 = vmatprep.subr.mxu0 0.0
  %895 = vmatpush1.xpose.msra.mxu0 0.0
  %896 = vmatprep.subr.mxu0 0.0
  %897 = vmatpush1.xpose.msra.mxu0 0.0
  %898 = vmatprep.subr.mxu0 0.0
  %899 = vmatpush1.xpose.msra.mxu0 0.0
  %900 = vmatprep.subr.mxu0 0.0
  %901 = vmatpush1.xpose.msra.mxu0 0.0
  %902 = vmatprep.subr.mxu0 0.0
  %903 = vmatpush1.xpose.msra.mxu0 0.0
  %904 = vmatprep.subr.mxu0 0.0
  %905 = vmatpush1.xpose.msra.mxu0 0.0
  %906 = vmatprep.subr.mxu0 0.0
  %907 = vmatpush1.xpose.msra.mxu0 0.0
  %908 = vmatprep.subr.mxu0 0.0
  %909 = vmatpush1.xpose.msra.mxu0 0.0
  %910 = vmatprep.subr.mxu0 0.0
  %911 = vmatpush1.xpose.msra.mxu0 0.0
  %912 = vmatprep.subr.mxu0 0.0
  %913 = vmatpush1.xpose.msra.mxu0 0.0
  %914 = vmatprep.subr.mxu0 0.0
  %915 = vmatpush1.xpose.msra.mxu0 0.0
  %916 = vmatprep.subr.mxu0 0.0
  %917 = vmatpush1.xpose.msra.mxu0 0.0
  %918 = vmatprep.subr.mxu0 0.0
  %919 = vmatpush1.xpose.msra.mxu0 0.0
  %920 = vmatprep.subr.mxu0 0.0
  %921 = vmatpush1.xpose.msra.mxu0 0.0
  %922 = vmatprep.subr.mxu0 0.0
  %923 = vmatpush1.xpose.msra.mxu0 0.0
  %924 = vmatprep.subr.mxu0 0.0
  %925 = vmatpush1.xpose.msra.mxu0 0.0
  %926 = vmatprep.subr.mxu0 0.0
  %927 = vmatpush1.xpose.msra.mxu0 0.0
  %928 = vmatprep.subr.mxu0 0.0
  %929 = vmatpush1.xpose.msra.mxu0 0.0
  %930 = vmatprep.subr.mxu0 0.0
  %931 = vmatpush1.xpose.msra.mxu0 0.0
  %932 = vmatprep.subr.mxu0 0.0
  %933 = vmatpush1.xpose.msra.mxu0 0.0
  %934 = vmatprep.subr.mxu0 0.0
  %935 = vmatpush1.xpose.msra.mxu0 0.0
  %936 = vmatprep.subr.mxu0 0.0
  %937 = vmatpush1.xpose.msra.mxu0 0.0
  %938 = vmatprep.subr.mxu0 0.0
  %939 = vmatpush1.xpose.msra.mxu0 0.0
  %940 = vmatprep.subr.mxu0 0.0
  %941 = vmatpush1.xpose.msra.mxu0 0.0
  %942 = vmatprep.subr.mxu0 0.0
  %943 = vmatpush1.xpose.msra.mxu0 0.0
  %944 = vmatprep.subr.mxu0 0.0
  %945 = vmatpush1.xpose.msra.mxu0 0.0
  %946 = vmatprep.subr.mxu0 0.0
  %947 = vmatpush1.xpose.msra.mxu0 0.0
  %948 = vmatprep.subr.mxu0 0.0
  %949 = vmatpush1.xpose.msra.mxu0 0.0
  %950 = vmatprep.mubr.f32.mxu0 0.0
  %951 = vmatmul.mubr.f32.gmra.mrb[0].mxu0 %v878
  %v952 = vpop.f32.mrb[0].mxu0
  %v953 = vadd.f32 0.0, %v952
  %v954 = vpop.f32.mrb[0].mxu0
  %955 = vmatprep.mubr.f32.mxu0 0.0
  %956 = vmatmul.mubr.f32.gmra.mrb[0].mxu0 %v880
  %v957 = vpop.f32.mrb[0].mxu0
  %v958 = vadd.f32 0.0, %v957
  %v959 = vpop.f32.mrb[0].mxu0
  %960 = vdwg.mxu0
  %v961 = vcombine.low %v525, %v533
  %v962 = vcombine.low %v541, %v540
  %v964 = vunpack.c.l.s4 1983009808
  %v965 = vunpack.c.0.s8 %v964
  %v966 = vlaneseq
  %v967 = vshrl.u32 %v966, 7
  %v968 = vsub.s32 %v965, %v967
  %v969 = vrot.slane %v961, %v968
  %v971 = vunpack.c.l.s4 1983009808
  %v972 = vunpack.c.0.s8 %v971
  %v973 = vlaneseq
  %v974 = vshrl.u32 %v973, 7
  %v975 = vsub.s32 %v972, %v974
  %v976 = vrot.slane %v962, %v975
  %v977 = vcombine.low %v969, %v976
  %v979 = vunpack.c.l.s4 1983009808
  %v980 = vunpack.c.0.s8 %v979
  %v981 = vlaneseq
  %v982 = vshrl.u32 %v981, 7
  %v983 = vsub.s32 %v980, %v982
  %v984 = vrot.slane %v542, %v983
  %v985 = vsel %vm663, %v977, 0
  %v987 = vsel %vm663, %v984, 0
  %v989 = vsel %vm663, %v303, 0
  %v991 = vsel %vm663, %v308, 0
  %993 = vmatprep.subr.mxu0 0.0
  %994 = vmatpush1.xpose.msra.mxu0 %v989
  %995 = vmatprep.subr.mxu0 0.0
  %996 = vmatpush1.xpose.msra.mxu0 %v991
  %997 = vmatprep.subr.mxu0 0.0
  %998 = vmatpush1.xpose.msra.mxu0 0.0
  %999 = vmatprep.subr.mxu0 0.0
  %1000 = vmatpush1.xpose.msra.mxu0 0.0
  %1001 = vmatprep.subr.mxu0 0.0
  %1002 = vmatpush1.xpose.msra.mxu0 0.0
  %1003 = vmatprep.subr.mxu0 0.0
  %1004 = vmatpush1.xpose.msra.mxu0 0.0
  %1005 = vmatprep.subr.mxu0 0.0
  %1006 = vmatpush1.xpose.msra.mxu0 0.0
  %1007 = vmatprep.subr.mxu0 0.0
  %1008 = vmatpush1.xpose.msra.mxu0 0.0
  %1009 = vmatprep.subr.mxu0 0.0
  %1010 = vmatpush1.xpose.msra.mxu0 0.0
  %1011 = vmatprep.subr.mxu0 0.0
  %1012 = vmatpush1.xpose.msra.mxu0 0.0
  %1013 = vmatprep.subr.mxu0 0.0
  %1014 = vmatpush1.xpose.msra.mxu0 0.0
  %1015 = vmatprep.subr.mxu0 0.0
  %1016 = vmatpush1.xpose.msra.mxu0 0.0
  %1017 = vmatprep.subr.mxu0 0.0
  %1018 = vmatpush1.xpose.msra.mxu0 0.0
  %1019 = vmatprep.subr.mxu0 0.0
  %1020 = vmatpush1.xpose.msra.mxu0 0.0
  %1021 = vmatprep.subr.mxu0 0.0
  %1022 = vmatpush1.xpose.msra.mxu0 0.0
  %1023 = vmatprep.subr.mxu0 0.0
  %1024 = vmatpush1.xpose.msra.mxu0 0.0
  %1025 = vmatprep.subr.mxu0 0.0
  %1026 = vmatpush1.xpose.msra.mxu0 0.0
  %1027 = vmatprep.subr.mxu0 0.0
  %1028 = vmatpush1.xpose.msra.mxu0 0.0
  %1029 = vmatprep.subr.mxu0 0.0
  %1030 = vmatpush1.xpose.msra.mxu0 0.0
  %1031 = vmatprep.subr.mxu0 0.0
  %1032 = vmatpush1.xpose.msra.mxu0 0.0
  %1033 = vmatprep.subr.mxu0 0.0
  %1034 = vmatpush1.xpose.msra.mxu0 0.0
  %1035 = vmatprep.subr.mxu0 0.0
  %1036 = vmatpush1.xpose.msra.mxu0 0.0
  %1037 = vmatprep.subr.mxu0 0.0
  %1038 = vmatpush1.xpose.msra.mxu0 0.0
  %1039 = vmatprep.subr.mxu0 0.0
  %1040 = vmatpush1.xpose.msra.mxu0 0.0
  %1041 = vmatprep.subr.mxu0 0.0
  %1042 = vmatpush1.xpose.msra.mxu0 0.0
  %1043 = vmatprep.subr.mxu0 0.0
  %1044 = vmatpush1.xpose.msra.mxu0 0.0
  %1045 = vmatprep.subr.mxu0 0.0
  %1046 = vmatpush1.xpose.msra.mxu0 0.0
  %1047 = vmatprep.subr.mxu0 0.0
  %1048 = vmatpush1.xpose.msra.mxu0 0.0
  %1049 = vmatprep.subr.mxu0 0.0
  %1050 = vmatpush1.xpose.msra.mxu0 0.0
  %1051 = vmatprep.subr.mxu0 0.0
  %1052 = vmatpush1.xpose.msra.mxu0 0.0
  %1053 = vmatprep.subr.mxu0 0.0
  %1054 = vmatpush1.xpose.msra.mxu0 0.0
  %1055 = vmatprep.subr.mxu0 0.0
  %1056 = vmatpush1.xpose.msra.mxu0 0.0
  %1057 = vmatprep.mubr.f32.mxu0 0.0
  %1058 = vmatmul.mubr.f32.gmra.mrb[0].mxu0 %v985
  %v1059 = vpop.f32.mrb[0].mxu0
  %v1060 = vadd.f32 0.0, %v1059
  %v1061 = vpop.f32.mrb[0].mxu0
  %1062 = vmatprep.mubr.f32.mxu0 0.0
  %1063 = vmatmul.mubr.f32.gmra.mrb[0].mxu0 %v987
  %v1064 = vpop.f32.mrb[0].mxu0
  %v1065 = vadd.f32 0.0, %v1064
  %v1066 = vpop.f32.mrb[0].mxu0
  %1067 = vdwg.mxu0
  %v1068 = vcombine.low %v544, %v546
  %v1069 = vcombine.low %v548, %v550
  %v1071 = vunpack.c.l.s4 1983009808
  %v1072 = vunpack.c.0.s8 %v1071
  %v1073 = vlaneseq
  %v1074 = vshrl.u32 %v1073, 7
  %v1075 = vsub.s32 %v1072, %v1074
  %v1076 = vrot.slane %v1068, %v1075
  %v1078 = vunpack.c.l.s4 1983009808
  %v1079 = vunpack.c.0.s8 %v1078
  %v1080 = vlaneseq
  %v1081 = vshrl.u32 %v1080, 7
  %v1082 = vsub.s32 %v1079, %v1081
  %v1083 = vrot.slane %v1069, %v1082
  %v1084 = vcombine.low %v1076, %v1083
  %v1086 = vunpack.c.l.s4 1983009808
  %v1087 = vunpack.c.0.s8 %v1086
  %v1088 = vlaneseq
  %v1089 = vshrl.u32 %v1088, 7
  %v1090 = vsub.s32 %v1087, %v1089
  %v1091 = vrot.slane %v552, %v1090
  %v1092 = vsel %vm663, %v1084, 0
  %v1094 = vsel %vm663, %v1091, 0
  %v1096 = vsel %vm663, %v592, 0
  %v1098 = vsel %vm663, %v594, 0
  %1100 = vmatprep.subr.mxu0 0.0
  %1101 = vmatpush1.xpose.msra.mxu0 %v1096
  %1102 = vmatprep.subr.mxu0 0.0
  %1103 = vmatpush1.xpose.msra.mxu0 %v1098
  %1104 = vmatprep.subr.mxu0 0.0
  %1105 = vmatpush1.xpose.msra.mxu0 0.0
  %1106 = vmatprep.subr.mxu0 0.0
  %1107 = vmatpush1.xpose.msra.mxu0 0.0
  %1108 = vmatprep.subr.mxu0 0.0
  %1109 = vmatpush1.xpose.msra.mxu0 0.0
  %1110 = vmatprep.subr.mxu0 0.0
  %1111 = vmatpush1.xpose.msra.mxu0 0.0
  %1112 = vmatprep.subr.mxu0 0.0
  %1113 = vmatpush1.xpose.msra.mxu0 0.0
  %1114 = vmatprep.subr.mxu0 0.0
  %1115 = vmatpush1.xpose.msra.mxu0 0.0
  %1116 = vmatprep.subr.mxu0 0.0
  %1117 = vmatpush1.xpose.msra.mxu0 0.0
  %1118 = vmatprep.subr.mxu0 0.0
  %1119 = vmatpush1.xpose.msra.mxu0 0.0
  %1120 = vmatprep.subr.mxu0 0.0
  %1121 = vmatpush1.xpose.msra.mxu0 0.0
  %1122 = vmatprep.subr.mxu0 0.0
  %1123 = vmatpush1.xpose.msra.mxu0 0.0
  %1124 = vmatprep.subr.mxu0 0.0
  %1125 = vmatpush1.xpose.msra.mxu0 0.0
  %1126 = vmatprep.subr.mxu0 0.0
  %1127 = vmatpush1.xpose.msra.mxu0 0.0
  %1128 = vmatprep.subr.mxu0 0.0
  %1129 = vmatpush1.xpose.msra.mxu0 0.0
  %1130 = vmatprep.subr.mxu0 0.0
  %1131 = vmatpush1.xpose.msra.mxu0 0.0
  %1132 = vmatprep.subr.mxu0 0.0
  %1133 = vmatpush1.xpose.msra.mxu0 0.0
  %1134 = vmatprep.subr.mxu0 0.0
  %1135 = vmatpush1.xpose.msra.mxu0 0.0
  %1136 = vmatprep.subr.mxu0 0.0
  %1137 = vmatpush1.xpose.msra.mxu0 0.0
  %1138 = vmatprep.subr.mxu0 0.0
  %1139 = vmatpush1.xpose.msra.mxu0 0.0
  %1140 = vmatprep.subr.mxu0 0.0
  %1141 = vmatpush1.xpose.msra.mxu0 0.0
  %1142 = vmatprep.subr.mxu0 0.0
  %1143 = vmatpush1.xpose.msra.mxu0 0.0
  %1144 = vmatprep.subr.mxu0 0.0
  %1145 = vmatpush1.xpose.msra.mxu0 0.0
  %1146 = vmatprep.subr.mxu0 0.0
  %1147 = vmatpush1.xpose.msra.mxu0 0.0
  %1148 = vmatprep.subr.mxu0 0.0
  %1149 = vmatpush1.xpose.msra.mxu0 0.0
  %1150 = vmatprep.subr.mxu0 0.0
  %1151 = vmatpush1.xpose.msra.mxu0 0.0
  %1152 = vmatprep.subr.mxu0 0.0
  %1153 = vmatpush1.xpose.msra.mxu0 0.0
  %1154 = vmatprep.subr.mxu0 0.0
  %1155 = vmatpush1.xpose.msra.mxu0 0.0
  %1156 = vmatprep.subr.mxu0 0.0
  %1157 = vmatpush1.xpose.msra.mxu0 0.0
  %1158 = vmatprep.subr.mxu0 0.0
  %1159 = vmatpush1.xpose.msra.mxu0 0.0
  %1160 = vmatprep.subr.mxu0 0.0
  %1161 = vmatpush1.xpose.msra.mxu0 0.0
  %1162 = vmatprep.subr.mxu0 0.0
  %1163 = vmatpush1.xpose.msra.mxu0 0.0
  %1164 = vmatprep.mubr.f32.mxu0 0.0
  %1165 = vmatmul.mubr.f32.gmra.mrb[0].mxu0 %v1092
  %v1166 = vpop.f32.mrb[0].mxu0
  %v1167 = vadd.f32 0.0, %v1166
  %v1168 = vpop.f32.mrb[0].mxu0
  %1169 = vmatprep.mubr.f32.mxu0 0.0
  %1170 = vmatmul.mubr.f32.gmra.mrb[0].mxu0 %v1094
  %v1171 = vpop.f32.mrb[0].mxu0
  %v1172 = vadd.f32 0.0, %v1171
  %v1173 = vpop.f32.mrb[0].mxu0
  %1174 = vdwg.mxu0
  %v1175 = vcombine.low %v554, %v556
  %v1176 = vcombine.low %v558, %v560
  %v1178 = vunpack.c.l.s4 1983009808
  %v1179 = vunpack.c.0.s8 %v1178
  %v1180 = vlaneseq
  %v1181 = vshrl.u32 %v1180, 7
  %v1182 = vsub.s32 %v1179, %v1181
  %v1183 = vrot.slane %v1175, %v1182
  %v1185 = vunpack.c.l.s4 1983009808
  %v1186 = vunpack.c.0.s8 %v1185
  %v1187 = vlaneseq
  %v1188 = vshrl.u32 %v1187, 7
  %v1189 = vsub.s32 %v1186, %v1188
  %v1190 = vrot.slane %v1176, %v1189
  %v1191 = vcombine.low %v1183, %v1190
  %v1193 = vunpack.c.l.s4 1983009808
  %v1194 = vunpack.c.0.s8 %v1193
  %v1195 = vlaneseq
  %v1196 = vshrl.u32 %v1195, 7
  %v1197 = vsub.s32 %v1194, %v1196
  %v1198 = vrot.slane %v562, %v1197
  %v1199 = vsel %vm663, %v1191, 0
  %v1201 = vsel %vm663, %v1198, 0
  %v1203 = vsel %vm663, %v596, 0
  %v1205 = vsel %vm663, %v598, 0
  %1207 = vmatprep.subr.mxu0 0.0
  %1208 = vmatpush1.xpose.msra.mxu0 %v1203
  %1209 = vmatprep.subr.mxu0 0.0
  %1210 = vmatpush1.xpose.msra.mxu0 %v1205
  %1211 = vmatprep.subr.mxu0 0.0
  %1212 = vmatpush1.xpose.msra.mxu0 0.0
  %1213 = vmatprep.subr.mxu0 0.0
  %1214 = vmatpush1.xpose.msra.mxu0 0.0
  %1215 = vmatprep.subr.mxu0 0.0
  %1216 = vmatpush1.xpose.msra.mxu0 0.0
  %1217 = vmatprep.subr.mxu0 0.0
  %1218 = vmatpush1.xpose.msra.mxu0 0.0
  %1219 = vmatprep.subr.mxu0 0.0
  %1220 = vmatpush1.xpose.msra.mxu0 0.0
  %1221 = vmatprep.subr.mxu0 0.0
  %1222 = vmatpush1.xpose.msra.mxu0 0.0
  %1223 = vmatprep.subr.mxu0 0.0
  %1224 = vmatpush1.xpose.msra.mxu0 0.0
  %1225 = vmatprep.subr.mxu0 0.0
  %1226 = vmatpush1.xpose.msra.mxu0 0.0
  %1227 = vmatprep.subr.mxu0 0.0
  %1228 = vmatpush1.xpose.msra.mxu0 0.0
  %1229 = vmatprep.subr.mxu0 0.0
  %1230 = vmatpush1.xpose.msra.mxu0 0.0
  %1231 = vmatprep.subr.mxu0 0.0
  %1232 = vmatpush1.xpose.msra.mxu0 0.0
  %1233 = vmatprep.subr.mxu0 0.0
  %1234 = vmatpush1.xpose.msra.mxu0 0.0
  %1235 = vmatprep.subr.mxu0 0.0
  %1236 = vmatpush1.xpose.msra.mxu0 0.0
  %1237 = vmatprep.subr.mxu0 0.0
  %1238 = vmatpush1.xpose.msra.mxu0 0.0
  %1239 = vmatprep.subr.mxu0 0.0
  %1240 = vmatpush1.xpose.msra.mxu0 0.0
  %1241 = vmatprep.subr.mxu0 0.0
  %1242 = vmatpush1.xpose.msra.mxu0 0.0
  %1243 = vmatprep.subr.mxu0 0.0
  %1244 = vmatpush1.xpose.msra.mxu0 0.0
  %1245 = vmatprep.subr.mxu0 0.0
  %1246 = vmatpush1.xpose.msra.mxu0 0.0
  %1247 = vmatprep.subr.mxu0 0.0
  %1248 = vmatpush1.xpose.msra.mxu0 0.0
  %1249 = vmatprep.subr.mxu0 0.0
  %1250 = vmatpush1.xpose.msra.mxu0 0.0
  %1251 = vmatprep.subr.mxu0 0.0
  %1252 = vmatpush1.xpose.msra.mxu0 0.0
  %1253 = vmatprep.subr.mxu0 0.0
  %1254 = vmatpush1.xpose.msra.mxu0 0.0
  %1255 = vmatprep.subr.mxu0 0.0
  %1256 = vmatpush1.xpose.msra.mxu0 0.0
  %1257 = vmatprep.subr.mxu0 0.0
  %1258 = vmatpush1.xpose.msra.mxu0 0.0
  %1259 = vmatprep.subr.mxu0 0.0
  %1260 = vmatpush1.xpose.msra.mxu0 0.0
  %1261 = vmatprep.subr.mxu0 0.0
  %1262 = vmatpush1.xpose.msra.mxu0 0.0
  %1263 = vmatprep.subr.mxu0 0.0
  %1264 = vmatpush1.xpose.msra.mxu0 0.0
  %1265 = vmatprep.subr.mxu0 0.0
  %1266 = vmatpush1.xpose.msra.mxu0 0.0
  %1267 = vmatprep.subr.mxu0 0.0
  %1268 = vmatpush1.xpose.msra.mxu0 0.0
  %1269 = vmatprep.subr.mxu0 0.0
  %1270 = vmatpush1.xpose.msra.mxu0 0.0
  %1271 = vmatprep.mubr.f32.mxu0 0.0
  %1272 = vmatmul.mubr.f32.gmra.mrb[0].mxu0 %v1199
  %v1273 = vpop.f32.mrb[0].mxu0
  %v1274 = vadd.f32 0.0, %v1273
  %v1275 = vpop.f32.mrb[0].mxu0
  %1276 = vmatprep.mubr.f32.mxu0 0.0
  %1277 = vmatmul.mubr.f32.gmra.mrb[0].mxu0 %v1201
  %v1278 = vpop.f32.mrb[0].mxu0
  %v1279 = vadd.f32 0.0, %v1278
  %v1280 = vpop.f32.mrb[0].mxu0
  %1281 = vdwg.mxu0
  %v1282 = vcombine.low %v564, %v566
  %v1283 = vcombine.low %v568, %v570
  %v1285 = vunpack.c.l.s4 1983009808
  %v1286 = vunpack.c.0.s8 %v1285
  %v1287 = vlaneseq
  %v1288 = vshrl.u32 %v1287, 7
  %v1289 = vsub.s32 %v1286, %v1288
  %v1290 = vrot.slane %v1282, %v1289
  %v1292 = vunpack.c.l.s4 1983009808
  %v1293 = vunpack.c.0.s8 %v1292
  %v1294 = vlaneseq
  %v1295 = vshrl.u32 %v1294, 7
  %v1296 = vsub.s32 %v1293, %v1295
  %v1297 = vrot.slane %v1283, %v1296
  %v1298 = vcombine.low %v1290, %v1297
  %v1300 = vunpack.c.l.s4 1983009808
  %v1301 = vunpack.c.0.s8 %v1300
  %v1302 = vlaneseq
  %v1303 = vshrl.u32 %v1302, 7
  %v1304 = vsub.s32 %v1301, %v1303
  %v1305 = vrot.slane %v572, %v1304
  %v1306 = vsel %vm663, %v1298, 0
  %v1308 = vsel %vm663, %v1305, 0
  %v1310 = vsel %vm663, %v600, 0
  %v1312 = vsel %vm663, %v602, 0
  %1314 = vmatprep.subr.mxu0 0.0
  %1315 = vmatpush1.xpose.msra.mxu0 %v1310
  %1316 = vmatprep.subr.mxu0 0.0
  %1317 = vmatpush1.xpose.msra.mxu0 %v1312
  %1318 = vmatprep.subr.mxu0 0.0
  %1319 = vmatpush1.xpose.msra.mxu0 0.0
  %1320 = vmatprep.subr.mxu0 0.0
  %1321 = vmatpush1.xpose.msra.mxu0 0.0
  %1322 = vmatprep.subr.mxu0 0.0
  %1323 = vmatpush1.xpose.msra.mxu0 0.0
  %1324 = vmatprep.subr.mxu0 0.0
  %1325 = vmatpush1.xpose.msra.mxu0 0.0
  %1326 = vmatprep.subr.mxu0 0.0
  %1327 = vmatpush1.xpose.msra.mxu0 0.0
  %1328 = vmatprep.subr.mxu0 0.0
  %1329 = vmatpush1.xpose.msra.mxu0 0.0
  %1330 = vmatprep.subr.mxu0 0.0
  %1331 = vmatpush1.xpose.msra.mxu0 0.0
  %1332 = vmatprep.subr.mxu0 0.0
  %1333 = vmatpush1.xpose.msra.mxu0 0.0
  %1334 = vmatprep.subr.mxu0 0.0
  %1335 = vmatpush1.xpose.msra.mxu0 0.0
  %1336 = vmatprep.subr.mxu0 0.0
  %1337 = vmatpush1.xpose.msra.mxu0 0.0
  %1338 = vmatprep.subr.mxu0 0.0
  %1339 = vmatpush1.xpose.msra.mxu0 0.0
  %1340 = vmatprep.subr.mxu0 0.0
  %1341 = vmatpush1.xpose.msra.mxu0 0.0
  %1342 = vmatprep.subr.mxu0 0.0
  %1343 = vmatpush1.xpose.msra.mxu0 0.0
  %1344 = vmatprep.subr.mxu0 0.0
  %1345 = vmatpush1.xpose.msra.mxu0 0.0
  %1346 = vmatprep.subr.mxu0 0.0
  %1347 = vmatpush1.xpose.msra.mxu0 0.0
  %1348 = vmatprep.subr.mxu0 0.0
  %1349 = vmatpush1.xpose.msra.mxu0 0.0
  %1350 = vmatprep.subr.mxu0 0.0
  %1351 = vmatpush1.xpose.msra.mxu0 0.0
  %1352 = vmatprep.subr.mxu0 0.0
  %1353 = vmatpush1.xpose.msra.mxu0 0.0
  %1354 = vmatprep.subr.mxu0 0.0
  %1355 = vmatpush1.xpose.msra.mxu0 0.0
  %1356 = vmatprep.subr.mxu0 0.0
  %1357 = vmatpush1.xpose.msra.mxu0 0.0
  %1358 = vmatprep.subr.mxu0 0.0
  %1359 = vmatpush1.xpose.msra.mxu0 0.0
  %1360 = vmatprep.subr.mxu0 0.0
  %1361 = vmatpush1.xpose.msra.mxu0 0.0
  %1362 = vmatprep.subr.mxu0 0.0
  %1363 = vmatpush1.xpose.msra.mxu0 0.0
  %1364 = vmatprep.subr.mxu0 0.0
  %1365 = vmatpush1.xpose.msra.mxu0 0.0
  %1366 = vmatprep.subr.mxu0 0.0
  %1367 = vmatpush1.xpose.msra.mxu0 0.0
  %1368 = vmatprep.subr.mxu0 0.0
  %1369 = vmatpush1.xpose.msra.mxu0 0.0
  %1370 = vmatprep.subr.mxu0 0.0
  %1371 = vmatpush1.xpose.msra.mxu0 0.0
  %1372 = vmatprep.subr.mxu0 0.0
  %1373 = vmatpush1.xpose.msra.mxu0 0.0
  %1374 = vmatprep.subr.mxu0 0.0
  %1375 = vmatpush1.xpose.msra.mxu0 0.0
  %1376 = vmatprep.subr.mxu0 0.0
  %1377 = vmatpush1.xpose.msra.mxu0 0.0
  %1378 = vmatprep.mubr.f32.mxu0 0.0
  %1379 = vmatmul.mubr.f32.gmra.mrb[0].mxu0 %v1306
  %v1380 = vpop.f32.mrb[0].mxu0
  %v1381 = vadd.f32 0.0, %v1380
  %v1382 = vpop.f32.mrb[0].mxu0
  %1383 = vmatprep.mubr.f32.mxu0 0.0
  %1384 = vmatmul.mubr.f32.gmra.mrb[0].mxu0 %v1308
  %v1385 = vpop.f32.mrb[0].mxu0
  %v1386 = vadd.f32 0.0, %v1385
  %v1387 = vpop.f32.mrb[0].mxu0
  %1388 = vdwg.mxu0
  %v1389 = vcombine.low %v574, %v576
  %v1390 = vcombine.low %v578, %v580
  %v1392 = vunpack.c.l.s4 1983009808
  %v1393 = vunpack.c.0.s8 %v1392
  %v1394 = vlaneseq
  %v1395 = vshrl.u32 %v1394, 7
  %v1396 = vsub.s32 %v1393, %v1395
  %v1397 = vrot.slane %v1389, %v1396
  %v1399 = vunpack.c.l.s4 1983009808
  %v1400 = vunpack.c.0.s8 %v1399
  %v1401 = vlaneseq
  %v1402 = vshrl.u32 %v1401, 7
  %v1403 = vsub.s32 %v1400, %v1402
  %v1404 = vrot.slane %v1390, %v1403
  %v1405 = vcombine.low %v1397, %v1404
  %v1407 = vunpack.c.l.s4 1983009808
  %v1408 = vunpack.c.0.s8 %v1407
  %v1409 = vlaneseq
  %v1410 = vshrl.u32 %v1409, 7
  %v1411 = vsub.s32 %v1408, %v1410
  %v1412 = vrot.slane %v582, %v1411
  %v1413 = vsel %vm663, %v1405, 0
  %v1415 = vsel %vm663, %v1412, 0
  %v1417 = vsel %vm663, %v604, 0
  %v1419 = vsel %vm663, %v606, 0
  %1421 = vmatprep.subr.mxu0 0.0
  %1422 = vmatpush1.xpose.msra.mxu0 %v1417
  %1423 = vmatprep.subr.mxu0 0.0
  %1424 = vmatpush1.xpose.msra.mxu0 %v1419
  %1425 = vmatprep.subr.mxu0 0.0
  %1426 = vmatpush1.xpose.msra.mxu0 0.0
  %1427 = vmatprep.subr.mxu0 0.0
  %1428 = vmatpush1.xpose.msra.mxu0 0.0
  %1429 = vmatprep.subr.mxu0 0.0
  %1430 = vmatpush1.xpose.msra.mxu0 0.0
  %1431 = vmatprep.subr.mxu0 0.0
  %1432 = vmatpush1.xpose.msra.mxu0 0.0
  %1433 = vmatprep.subr.mxu0 0.0
  %1434 = vmatpush1.xpose.msra.mxu0 0.0
  %1435 = vmatprep.subr.mxu0 0.0
  %1436 = vmatpush1.xpose.msra.mxu0 0.0
  %1437 = vmatprep.subr.mxu0 0.0
  %1438 = vmatpush1.xpose.msra.mxu0 0.0
  %1439 = vmatprep.subr.mxu0 0.0
  %1440 = vmatpush1.xpose.msra.mxu0 0.0
  %1441 = vmatprep.subr.mxu0 0.0
  %1442 = vmatpush1.xpose.msra.mxu0 0.0
  %1443 = vmatprep.subr.mxu0 0.0
  %1444 = vmatpush1.xpose.msra.mxu0 0.0
  %1445 = vmatprep.subr.mxu0 0.0
  %1446 = vmatpush1.xpose.msra.mxu0 0.0
  %1447 = vmatprep.subr.mxu0 0.0
  %1448 = vmatpush1.xpose.msra.mxu0 0.0
  %1449 = vmatprep.subr.mxu0 0.0
  %1450 = vmatpush1.xpose.msra.mxu0 0.0
  %1451 = vmatprep.subr.mxu0 0.0
  %1452 = vmatpush1.xpose.msra.mxu0 0.0
  %1453 = vmatprep.subr.mxu0 0.0
  %1454 = vmatpush1.xpose.msra.mxu0 0.0
  %1455 = vmatprep.subr.mxu0 0.0
  %1456 = vmatpush1.xpose.msra.mxu0 0.0
  %1457 = vmatprep.subr.mxu0 0.0
  %1458 = vmatpush1.xpose.msra.mxu0 0.0
  %1459 = vmatprep.subr.mxu0 0.0
  %1460 = vmatpush1.xpose.msra.mxu0 0.0
  %1461 = vmatprep.subr.mxu0 0.0
  %1462 = vmatpush1.xpose.msra.mxu0 0.0
  %1463 = vmatprep.subr.mxu0 0.0
  %1464 = vmatpush1.xpose.msra.mxu0 0.0
  %1465 = vmatprep.subr.mxu0 0.0
  %1466 = vmatpush1.xpose.msra.mxu0 0.0
  %1467 = vmatprep.subr.mxu0 0.0
  %1468 = vmatpush1.xpose.msra.mxu0 0.0
  %1469 = vmatprep.subr.mxu0 0.0
  %1470 = vmatpush1.xpose.msra.mxu0 0.0
  %1471 = vmatprep.subr.mxu0 0.0
  %1472 = vmatpush1.xpose.msra.mxu0 0.0
  %1473 = vmatprep.subr.mxu0 0.0
  %1474 = vmatpush1.xpose.msra.mxu0 0.0
  %1475 = vmatprep.subr.mxu0 0.0
  %1476 = vmatpush1.xpose.msra.mxu0 0.0
  %1477 = vmatprep.subr.mxu0 0.0
  %1478 = vmatpush1.xpose.msra.mxu0 0.0
  %1479 = vmatprep.subr.mxu0 0.0
  %1480 = vmatpush1.xpose.msra.mxu0 0.0
  %1481 = vmatprep.subr.mxu0 0.0
  %1482 = vmatpush1.xpose.msra.mxu0 0.0
  %1483 = vmatprep.subr.mxu0 0.0
  %1484 = vmatpush1.xpose.msra.mxu0 0.0
  %1485 = vmatprep.mubr.f32.mxu0 0.0
  %1486 = vmatmul.mubr.f32.gmra.mrb[0].mxu0 %v1413
  %v1487 = vpop.f32.mrb[0].mxu0
  %v1488 = vadd.f32 0.0, %v1487
  %v1489 = vpop.f32.mrb[0].mxu0
  %1490 = vmatprep.mubr.f32.mxu0 0.0
  %1491 = vmatmul.mubr.f32.gmra.mrb[0].mxu0 %v1415
  %v1492 = vpop.f32.mrb[0].mxu0
  %v1493 = vadd.f32 0.0, %v1492
  %v1494 = vpop.f32.mrb[0].mxu0
  %1495 = vdwg.mxu0
  %v1496 = vmul.f32 %v739, 0.4472136
  %v1497 = vmul.f32 %v744, 0.4472136
  %v1498 = vmul.f32 %v846, 0.4472136
  %v1499 = vmul.f32 %v851, 0.4472136
  %v1500 = vmul.f32 %v953, 0.4472136
  %v1501 = vmul.f32 %v958, 0.4472136
  %v1502 = vmul.f32 %v1060, 0.4472136
  %v1503 = vmul.f32 %v1065, 0.4472136
  %v1504 = vmul.f32 %v1167, 0.4472136
  %v1505 = vmul.f32 %v1172, 0.4472136
  %v1506 = vmul.f32 %v1274, 0.4472136
  %v1507 = vmul.f32 %v1279, 0.4472136
  %v1508 = vmul.f32 %v1381, 0.4472136
  %v1509 = vmul.f32 %v1386, 0.4472136
  %v1510 = vmul.f32 %v1488, 0.4472136
  %v1511 = vmul.f32 %v1493, 0.4472136
  %vm1512 = vcmask 130048
  %v1513 = vsel %vm1512, %v1496, -inf
  %1514 = vmax.xlane.f32.xlu0 %v1513
  %v1515 = vpop.xlane.xlu0 %1514
  %vm1516 = vcmask 123904
  %v1517 = vsel %vm1516, %v1497, -inf
  %1518 = vmax.xlane.f32.xlu0 %v1517
  %v1519 = vpop.xlane.xlu0 %1518
  %v1520 = vsel %vm1512, %v1498, -inf
  %1521 = vmax.xlane.f32.xlu0 %v1520
  %v1522 = vpop.xlane.xlu0 %1521
  %v1523 = vsel %vm1516, %v1499, -inf
  %1524 = vmax.xlane.f32.xlu0 %v1523
  %v1525 = vpop.xlane.xlu0 %1524
  %v1526 = vsel %vm1512, %v1500, -inf
  %1527 = vmax.xlane.f32.xlu0 %v1526
  %v1528 = vpop.xlane.xlu0 %1527
  %v1529 = vsel %vm1516, %v1501, -inf
  %1530 = vmax.xlane.f32.xlu0 %v1529
  %v1531 = vpop.xlane.xlu0 %1530
  %v1532 = vsel %vm1512, %v1502, -inf
  %1533 = vmax.xlane.f32.xlu0 %v1532
  %v1534 = vpop.xlane.xlu0 %1533
  %v1535 = vsel %vm1516, %v1503, -inf
  %1536 = vmax.xlane.f32.xlu0 %v1535
  %v1537 = vpop.xlane.xlu0 %1536
  %v1538 = vsel %vm1512, %v1504, -inf
  %1539 = vmax.xlane.f32.xlu0 %v1538
  %v1540 = vpop.xlane.xlu0 %1539
  %v1541 = vsel %vm1516, %v1505, -inf
  %1542 = vmax.xlane.f32.xlu0 %v1541
  %v1543 = vpop.xlane.xlu0 %1542
  %v1544 = vsel %vm1512, %v1506, -inf
  %1545 = vmax.xlane.f32.xlu0 %v1544
  %v1546 = vpop.xlane.xlu0 %1545
  %v1547 = vsel %vm1516, %v1507, -inf
  %1548 = vmax.xlane.f32.xlu0 %v1547
  %v1549 = vpop.xlane.xlu0 %1548
  %v1550 = vsel %vm1512, %v1508, -inf
  %1551 = vmax.xlane.f32.xlu0 %v1550
  %v1552 = vpop.xlane.xlu0 %1551
  %v1553 = vsel %vm1516, %v1509, -inf
  %1554 = vmax.xlane.f32.xlu0 %v1553
  %v1555 = vpop.xlane.xlu0 %1554
  %v1556 = vsel %vm1512, %v1510, -inf
  %1557 = vmax.xlane.f32.xlu0 %v1556
  %v1558 = vpop.xlane.xlu0 %1557
  %v1559 = vsel %vm1516, %v1511, -inf
  %1560 = vmax.xlane.f32.xlu0 %v1559
  %v1561 = vpop.xlane.xlu0 %1560
  %v1562 = vsub.f32 %v1496, %v1515
  %v1563 = vsub.f32 %v1497, %v1519
  %v1564 = vsub.f32 %v1498, %v1522
  %v1565 = vsub.f32 %v1499, %v1525
  %v1566 = vsub.f32 %v1500, %v1528
  %v1567 = vsub.f32 %v1501, %v1531
  %v1568 = vsub.f32 %v1502, %v1534
  %v1569 = vsub.f32 %v1503, %v1537
  %v1570 = vsub.f32 %v1504, %v1540
  %v1571 = vsub.f32 %v1505, %v1543
  %v1572 = vsub.f32 %v1506, %v1546
  %v1573 = vsub.f32 %v1507, %v1549
  %v1574 = vsub.f32 %v1508, %v1552
  %v1575 = vsub.f32 %v1509, %v1555
  %v1576 = vsub.f32 %v1510, %v1558
  %v1577 = vsub.f32 %v1511, %v1561
  %v1578 = vmul.f32 %v1562, 1.442695
  %v1579 = vpow.pop %v1578
  %v1580 = vmul.f32 %v1563, 1.442695
  %v1581 = vpow.pop %v1580
  %v1582 = vmul.f32 %v1564, 1.442695
  %v1583 = vpow.pop %v1582
  %v1584 = vmul.f32 %v1565, 1.442695
  %v1585 = vpow.pop %v1584
  %v1586 = vmul.f32 %v1566, 1.442695
  %v1587 = vpow.pop %v1586
  %v1588 = vmul.f32 %v1567, 1.442695
  %v1589 = vpow.pop %v1588
  %v1590 = vmul.f32 %v1568, 1.442695
  %v1591 = vpow.pop %v1590
  %v1592 = vmul.f32 %v1569, 1.442695
  %v1593 = vpow.pop %v1592
  %v1594 = vmul.f32 %v1570, 1.442695
  %v1595 = vpow.pop %v1594
  %v1596 = vmul.f32 %v1571, 1.442695
  %v1597 = vpow.pop %v1596
  %v1598 = vmul.f32 %v1572, 1.442695
  %v1599 = vpow.pop %v1598
  %v1600 = vmul.f32 %v1573, 1.442695
  %v1601 = vpow.pop %v1600
  %v1602 = vmul.f32 %v1574, 1.442695
  %v1603 = vpow.pop %v1602
  %v1604 = vmul.f32 %v1575, 1.442695
  %v1605 = vpow.pop %v1604
  %v1606 = vmul.f32 %v1576, 1.442695
  %v1607 = vpow.pop %v1606
  %v1608 = vmul.f32 %v1577, 1.442695
  %v1609 = vpow.pop %v1608
  %v1610 = vsel %vm1512, %v1579, 0.0
  %1611 = vadd.xlane.f32.xlu0 %v1610
  %v1612 = vpop.xlane.xlu0 %1611
  %v1613 = vsel %vm1516, %v1581, 0.0
  %1614 = vadd.xlane.f32.xlu0 %v1613
  %v1615 = vpop.xlane.xlu0 %1614
  %v1616 = vsel %vm1512, %v1583, 0.0
  %1617 = vadd.xlane.f32.xlu0 %v1616
  %v1618 = vpop.xlane.xlu0 %1617
  %v1619 = vsel %vm1516, %v1585, 0.0
  %1620 = vadd.xlane.f32.xlu0 %v1619
  %v1621 = vpop.xlane.xlu0 %1620
  %v1622 = vsel %vm1512, %v1587, 0.0
  %1623 = vadd.xlane.f32.xlu0 %v1622
  %v1624 = vpop.xlane.xlu0 %1623
  %v1625 = vsel %vm1516, %v1589, 0.0
  %1626 = vadd.xlane.f32.xlu0 %v1625
  %v1627 = vpop.xlane.xlu0 %1626
  %v1628 = vsel %vm1512, %v1591, 0.0
  %1629 = vadd.xlane.f32.xlu0 %v1628
  %v1630 = vpop.xlane.xlu0 %1629
  %v1631 = vsel %vm1516, %v1593, 0.0
  %1632 = vadd.xlane.f32.xlu0 %v1631
  %v1633 = vpop.xlane.xlu0 %1632
  %v1634 = vsel %vm1512, %v1595, 0.0
  %1635 = vadd.xlane.f32.xlu0 %v1634
  %v1636 = vpop.xlane.xlu0 %1635
  %v1637 = vsel %vm1516, %v1597, 0.0
  %1638 = vadd.xlane.f32.xlu0 %v1637
  %v1639 = vpop.xlane.xlu0 %1638
  %v1640 = vsel %vm1512, %v1599, 0.0
  %1641 = vadd.xlane.f32.xlu0 %v1640
  %v1642 = vpop.xlane.xlu0 %1641
  %v1643 = vsel %vm1516, %v1601, 0.0
  %1644 = vadd.xlane.f32.xlu0 %v1643
  %v1645 = vpop.xlane.xlu0 %1644
  %v1646 = vsel %vm1512, %v1603, 0.0
  %1647 = vadd.xlane.f32.xlu0 %v1646
  %v1648 = vpop.xlane.xlu0 %1647
  %v1649 = vsel %vm1516, %v1605, 0.0
  %1650 = vadd.xlane.f32.xlu0 %v1649
  %v1651 = vpop.xlane.xlu0 %1650
  %v1652 = vsel %vm1512, %v1607, 0.0
  %1653 = vadd.xlane.f32.xlu0 %v1652
  %v1654 = vpop.xlane.xlu0 %1653
  %v1655 = vsel %vm1516, %v1609, 0.0
  %1656 = vadd.xlane.f32.xlu0 %v1655
  %v1657 = vpop.xlane.xlu0 %1656
  %v1658 = vrcp.pop %v1612
  %v1659 = vmul.f32 %v1579, %v1658
  %v1660 = vrcp.pop %v1615
  %v1661 = vmul.f32 %v1581, %v1660
  %v1662 = vrcp.pop %v1618
  %v1663 = vmul.f32 %v1583, %v1662
  %v1664 = vrcp.pop %v1621
  %v1665 = vmul.f32 %v1585, %v1664
  %v1666 = vrcp.pop %v1624
  %v1667 = vmul.f32 %v1587, %v1666
  %v1668 = vrcp.pop %v1627
  %v1669 = vmul.f32 %v1589, %v1668
  %v1670 = vrcp.pop %v1630
  %v1671 = vmul.f32 %v1591, %v1670
  %v1672 = vrcp.pop %v1633
  %v1673 = vmul.f32 %v1593, %v1672
  %v1674 = vrcp.pop %v1636
  %v1675 = vmul.f32 %v1595, %v1674
  %v1676 = vrcp.pop %v1639
  %v1677 = vmul.f32 %v1597, %v1676
  %v1678 = vrcp.pop %v1642
  %v1679 = vmul.f32 %v1599, %v1678
  %v1680 = vrcp.pop %v1645
  %v1681 = vmul.f32 %v1601, %v1680
  %v1682 = vrcp.pop %v1648
  %v1683 = vmul.f32 %v1603, %v1682
  %v1684 = vrcp.pop %v1651
  %v1685 = vmul.f32 %v1605, %v1684
  %v1686 = vrcp.pop %v1654
  %v1687 = vmul.f32 %v1607, %v1686
  %v1688 = vrcp.pop %v1657
  %v1689 = vmul.f32 %v1609, %v1688
  %v1691 = vsel %vm1512, %v1659, 0
  %v1694 = vsel %vm1512, %v1661, 0
  %1696 = vmatprep.subr.mxu0 0.0
  %1697 = vmatpush1.msra.mxu0 %v415
  %1698 = vmatprep.subr.mxu0 0.0
  %1699 = vmatpush1.msra.mxu0 %v420
  %1700 = vmatprep.subr.mxu0 0.0
  %1701 = vmatpush1.msra.mxu0 0.0
  %1702 = vmatprep.subr.mxu0 0.0
  %1703 = vmatpush1.msra.mxu0 0.0
  %1704 = vmatprep.subr.mxu0 0.0
  %1705 = vmatpush1.msra.mxu0 0.0
  %1706 = vmatprep.subr.mxu0 0.0
  %1707 = vmatpush1.msra.mxu0 0.0
  %1708 = vmatprep.subr.mxu0 0.0
  %1709 = vmatpush1.msra.mxu0 0.0
  %1710 = vmatprep.subr.mxu0 0.0
  %1711 = vmatpush1.msra.mxu0 0.0
  %1712 = vmatprep.subr.mxu0 0.0
  %1713 = vmatpush1.msra.mxu0 0.0
  %1714 = vmatprep.subr.mxu0 0.0
  %1715 = vmatpush1.msra.mxu0 0.0
  %1716 = vmatprep.subr.mxu0 0.0
  %1717 = vmatpush1.msra.mxu0 0.0
  %1718 = vmatprep.subr.mxu0 0.0
  %1719 = vmatpush1.msra.mxu0 0.0
  %1720 = vmatprep.subr.mxu0 0.0
  %1721 = vmatpush1.msra.mxu0 0.0
  %1722 = vmatprep.subr.mxu0 0.0
  %1723 = vmatpush1.msra.mxu0 0.0
  %1724 = vmatprep.subr.mxu0 0.0
  %1725 = vmatpush1.msra.mxu0 0.0
  %1726 = vmatprep.subr.mxu0 0.0
  %1727 = vmatpush1.msra.mxu0 0.0
  %1728 = vmatprep.subr.mxu0 0.0
  %1729 = vmatpush1.msra.mxu0 0.0
  %1730 = vmatprep.subr.mxu0 0.0
  %1731 = vmatpush1.msra.mxu0 0.0
  %1732 = vmatprep.subr.mxu0 0.0
  %1733 = vmatpush1.msra.mxu0 0.0
  %1734 = vmatprep.subr.mxu0 0.0
  %1735 = vmatpush1.msra.mxu0 0.0
  %1736 = vmatprep.subr.mxu0 0.0
  %1737 = vmatpush1.msra.mxu0 0.0
  %1738 = vmatprep.subr.mxu0 0.0
  %1739 = vmatpush1.msra.mxu0 0.0
  %1740 = vmatprep.subr.mxu0 0.0
  %1741 = vmatpush1.msra.mxu0 0.0
  %1742 = vmatprep.subr.mxu0 0.0
  %1743 = vmatpush1.msra.mxu0 0.0
  %1744 = vmatprep.subr.mxu0 0.0
  %1745 = vmatpush1.msra.mxu0 0.0
  %1746 = vmatprep.subr.mxu0 0.0
  %1747 = vmatpush1.msra.mxu0 0.0
  %1748 = vmatprep.subr.mxu0 0.0
  %1749 = vmatpush1.msra.mxu0 0.0
  %1750 = vmatprep.subr.mxu0 0.0
  %1751 = vmatpush1.msra.mxu0 0.0
  %1752 = vmatprep.subr.mxu0 0.0
  %1753 = vmatpush1.msra.mxu0 0.0
  %1754 = vmatprep.subr.mxu0 0.0
  %1755 = vmatpush1.msra.mxu0 0.0
  %1756 = vmatprep.subr.mxu0 0.0
  %1757 = vmatpush1.msra.mxu0 0.0
  %1758 = vmatprep.subr.mxu0 0.0
  %1759 = vmatpush1.msra.mxu0 0.0
  %1760 = vmatprep.mubr.f32.mxu0 0.0
  %1761 = vmatmul.mubr.f32.gmra.mrb[0].mxu0 %v1691
  %v1762 = vpop.f32.mrb[0].mxu0
  %v1763 = vadd.f32 0.0, %v1762
  %v1764 = vpop.f32.mrb[0].mxu0
  %1765 = vmatprep.mubr.f32.mxu0 0.0
  %1766 = vmatmul.mubr.f32.gmra.mrb[0].mxu0 %v1694
  %v1767 = vpop.f32.mrb[0].mxu0
  %v1768 = vadd.f32 0.0, %v1767
  %v1769 = vpop.f32.mrb[0].mxu0
  %1770 = vdwg.mxu0
  %v1772 = vsel %vm1512, %v1663, 0
  %v1775 = vsel %vm1512, %v1665, 0
  %1777 = vmatprep.subr.mxu0 0.0
  %1778 = vmatpush1.msra.mxu0 %v425
  %1779 = vmatprep.subr.mxu0 0.0
  %1780 = vmatpush1.msra.mxu0 %v430
  %1781 = vmatprep.subr.mxu0 0.0
  %1782 = vmatpush1.msra.mxu0 0.0
  %1783 = vmatprep.subr.mxu0 0.0
  %1784 = vmatpush1.msra.mxu0 0.0
  %1785 = vmatprep.subr.mxu0 0.0
  %1786 = vmatpush1.msra.mxu0 0.0
  %1787 = vmatprep.subr.mxu0 0.0
  %1788 = vmatpush1.msra.mxu0 0.0
  %1789 = vmatprep.subr.mxu0 0.0
  %1790 = vmatpush1.msra.mxu0 0.0
  %1791 = vmatprep.subr.mxu0 0.0
  %1792 = vmatpush1.msra.mxu0 0.0
  %1793 = vmatprep.subr.mxu0 0.0
  %1794 = vmatpush1.msra.mxu0 0.0
  %1795 = vmatprep.subr.mxu0 0.0
  %1796 = vmatpush1.msra.mxu0 0.0
  %1797 = vmatprep.subr.mxu0 0.0
  %1798 = vmatpush1.msra.mxu0 0.0
  %1799 = vmatprep.subr.mxu0 0.0
  %1800 = vmatpush1.msra.mxu0 0.0
  %1801 = vmatprep.subr.mxu0 0.0
  %1802 = vmatpush1.msra.mxu0 0.0
  %1803 = vmatprep.subr.mxu0 0.0
  %1804 = vmatpush1.msra.mxu0 0.0
  %1805 = vmatprep.subr.mxu0 0.0
  %1806 = vmatpush1.msra.mxu0 0.0
  %1807 = vmatprep.subr.mxu0 0.0
  %1808 = vmatpush1.msra.mxu0 0.0
  %1809 = vmatprep.subr.mxu0 0.0
  %1810 = vmatpush1.msra.mxu0 0.0
  %1811 = vmatprep.subr.mxu0 0.0
  %1812 = vmatpush1.msra.mxu0 0.0
  %1813 = vmatprep.subr.mxu0 0.0
  %1814 = vmatpush1.msra.mxu0 0.0
  %1815 = vmatprep.subr.mxu0 0.0
  %1816 = vmatpush1.msra.mxu0 0.0
  %1817 = vmatprep.subr.mxu0 0.0
  %1818 = vmatpush1.msra.mxu0 0.0
  %1819 = vmatprep.subr.mxu0 0.0
  %1820 = vmatpush1.msra.mxu0 0.0
  %1821 = vmatprep.subr.mxu0 0.0
  %1822 = vmatpush1.msra.mxu0 0.0
  %1823 = vmatprep.subr.mxu0 0.0
  %1824 = vmatpush1.msra.mxu0 0.0
  %1825 = vmatprep.subr.mxu0 0.0
  %1826 = vmatpush1.msra.mxu0 0.0
  %1827 = vmatprep.subr.mxu0 0.0
  %1828 = vmatpush1.msra.mxu0 0.0
  %1829 = vmatprep.subr.mxu0 0.0
  %1830 = vmatpush1.msra.mxu0 0.0
  %1831 = vmatprep.subr.mxu0 0.0
  %1832 = vmatpush1.msra.mxu0 0.0
  %1833 = vmatprep.subr.mxu0 0.0
  %1834 = vmatpush1.msra.mxu0 0.0
  %1835 = vmatprep.subr.mxu0 0.0
  %1836 = vmatpush1.msra.mxu0 0.0
  %1837 = vmatprep.subr.mxu0 0.0
  %1838 = vmatpush1.msra.mxu0 0.0
  %1839 = vmatprep.subr.mxu0 0.0
  %1840 = vmatpush1.msra.mxu0 0.0
  %1841 = vmatprep.mubr.f32.mxu0 0.0
  %1842 = vmatmul.mubr.f32.gmra.mrb[0].mxu0 %v1772
  %v1843 = vpop.f32.mrb[0].mxu0
  %v1844 = vadd.f32 0.0, %v1843
  %v1845 = vpop.f32.mrb[0].mxu0
  %1846 = vmatprep.mubr.f32.mxu0 0.0
  %1847 = vmatmul.mubr.f32.gmra.mrb[0].mxu0 %v1775
  %v1848 = vpop.f32.mrb[0].mxu0
  %v1849 = vadd.f32 0.0, %v1848
  %v1850 = vpop.f32.mrb[0].mxu0
  %1851 = vdwg.mxu0
  %v1853 = vsel %vm1512, %v1667, 0
  %v1856 = vsel %vm1512, %v1669, 0
  %1858 = vmatprep.subr.mxu0 0.0
  %1859 = vmatpush1.msra.mxu0 %v435
  %1860 = vmatprep.subr.mxu0 0.0
  %1861 = vmatpush1.msra.mxu0 %v440
  %1862 = vmatprep.subr.mxu0 0.0
  %1863 = vmatpush1.msra.mxu0 0.0
  %1864 = vmatprep.subr.mxu0 0.0
  %1865 = vmatpush1.msra.mxu0 0.0
  %1866 = vmatprep.subr.mxu0 0.0
  %1867 = vmatpush1.msra.mxu0 0.0
  %1868 = vmatprep.subr.mxu0 0.0
  %1869 = vmatpush1.msra.mxu0 0.0
  %1870 = vmatprep.subr.mxu0 0.0
  %1871 = vmatpush1.msra.mxu0 0.0
  %1872 = vmatprep.subr.mxu0 0.0
  %1873 = vmatpush1.msra.mxu0 0.0
  %1874 = vmatprep.subr.mxu0 0.0
  %1875 = vmatpush1.msra.mxu0 0.0
  %1876 = vmatprep.subr.mxu0 0.0
  %1877 = vmatpush1.msra.mxu0 0.0
  %1878 = vmatprep.subr.mxu0 0.0
  %1879 = vmatpush1.msra.mxu0 0.0
  %1880 = vmatprep.subr.mxu0 0.0
  %1881 = vmatpush1.msra.mxu0 0.0
  %1882 = vmatprep.subr.mxu0 0.0
  %1883 = vmatpush1.msra.mxu0 0.0
  %1884 = vmatprep.subr.mxu0 0.0
  %1885 = vmatpush1.msra.mxu0 0.0
  %1886 = vmatprep.subr.mxu0 0.0
  %1887 = vmatpush1.msra.mxu0 0.0
  %1888 = vmatprep.subr.mxu0 0.0
  %1889 = vmatpush1.msra.mxu0 0.0
  %1890 = vmatprep.subr.mxu0 0.0
  %1891 = vmatpush1.msra.mxu0 0.0
  %1892 = vmatprep.subr.mxu0 0.0
  %1893 = vmatpush1.msra.mxu0 0.0
  %1894 = vmatprep.subr.mxu0 0.0
  %1895 = vmatpush1.msra.mxu0 0.0
  %1896 = vmatprep.subr.mxu0 0.0
  %1897 = vmatpush1.msra.mxu0 0.0
  %1898 = vmatprep.subr.mxu0 0.0
  %1899 = vmatpush1.msra.mxu0 0.0
  %1900 = vmatprep.subr.mxu0 0.0
  %1901 = vmatpush1.msra.mxu0 0.0
  %1902 = vmatprep.subr.mxu0 0.0
  %1903 = vmatpush1.msra.mxu0 0.0
  %1904 = vmatprep.subr.mxu0 0.0
  %1905 = vmatpush1.msra.mxu0 0.0
  %1906 = vmatprep.subr.mxu0 0.0
  %1907 = vmatpush1.msra.mxu0 0.0
  %1908 = vmatprep.subr.mxu0 0.0
  %1909 = vmatpush1.msra.mxu0 0.0
  %1910 = vmatprep.subr.mxu0 0.0
  %1911 = vmatpush1.msra.mxu0 0.0
  %1912 = vmatprep.subr.mxu0 0.0
  %1913 = vmatpush1.msra.mxu0 0.0
  %1914 = vmatprep.subr.mxu0 0.0
  %1915 = vmatpush1.msra.mxu0 0.0
  %1916 = vmatprep.subr.mxu0 0.0
  %1917 = vmatpush1.msra.mxu0 0.0
  %1918 = vmatprep.subr.mxu0 0.0
  %1919 = vmatpush1.msra.mxu0 0.0
  %1920 = vmatprep.subr.mxu0 0.0
  %1921 = vmatpush1.msra.mxu0 0.0
  %1922 = vmatprep.mubr.f32.mxu0 0.0
  %1923 = vmatmul.mubr.f32.gmra.mrb[0].mxu0 %v1853
  %v1924 = vpop.f32.mrb[0].mxu0
  %v1925 = vadd.f32 0.0, %v1924
  %v1926 = vpop.f32.mrb[0].mxu0
  %1927 = vmatprep.mubr.f32.mxu0 0.0
  %1928 = vmatmul.mubr.f32.gmra.mrb[0].mxu0 %v1856
  %v1929 = vpop.f32.mrb[0].mxu0
  %v1930 = vadd.f32 0.0, %v1929
  %v1931 = vpop.f32.mrb[0].mxu0
  %1932 = vdwg.mxu0
  %v1934 = vsel %vm1512, %v1671, 0
  %v1937 = vsel %vm1512, %v1673, 0
  %1939 = vmatprep.subr.mxu0 0.0
  %1940 = vmatpush1.msra.mxu0 %v445
  %1941 = vmatprep.subr.mxu0 0.0
  %1942 = vmatpush1.msra.mxu0 %v450
  %1943 = vmatprep.subr.mxu0 0.0
  %1944 = vmatpush1.msra.mxu0 0.0
  %1945 = vmatprep.subr.mxu0 0.0
  %1946 = vmatpush1.msra.mxu0 0.0
  %1947 = vmatprep.subr.mxu0 0.0
  %1948 = vmatpush1.msra.mxu0 0.0
  %1949 = vmatprep.subr.mxu0 0.0
  %1950 = vmatpush1.msra.mxu0 0.0
  %1951 = vmatprep.subr.mxu0 0.0
  %1952 = vmatpush1.msra.mxu0 0.0
  %1953 = vmatprep.subr.mxu0 0.0
  %1954 = vmatpush1.msra.mxu0 0.0
  %1955 = vmatprep.subr.mxu0 0.0
  %1956 = vmatpush1.msra.mxu0 0.0
  %1957 = vmatprep.subr.mxu0 0.0
  %1958 = vmatpush1.msra.mxu0 0.0
  %1959 = vmatprep.subr.mxu0 0.0
  %1960 = vmatpush1.msra.mxu0 0.0
  %1961 = vmatprep.subr.mxu0 0.0
  %1962 = vmatpush1.msra.mxu0 0.0
  %1963 = vmatprep.subr.mxu0 0.0
  %1964 = vmatpush1.msra.mxu0 0.0
  %1965 = vmatprep.subr.mxu0 0.0
  %1966 = vmatpush1.msra.mxu0 0.0
  %1967 = vmatprep.subr.mxu0 0.0
  %1968 = vmatpush1.msra.mxu0 0.0
  %1969 = vmatprep.subr.mxu0 0.0
  %1970 = vmatpush1.msra.mxu0 0.0
  %1971 = vmatprep.subr.mxu0 0.0
  %1972 = vmatpush1.msra.mxu0 0.0
  %1973 = vmatprep.subr.mxu0 0.0
  %1974 = vmatpush1.msra.mxu0 0.0
  %1975 = vmatprep.subr.mxu0 0.0
  %1976 = vmatpush1.msra.mxu0 0.0
  %1977 = vmatprep.subr.mxu0 0.0
  %1978 = vmatpush1.msra.mxu0 0.0
  %1979 = vmatprep.subr.mxu0 0.0
  %1980 = vmatpush1.msra.mxu0 0.0
  %1981 = vmatprep.subr.mxu0 0.0
  %1982 = vmatpush1.msra.mxu0 0.0
  %1983 = vmatprep.subr.mxu0 0.0
  %1984 = vmatpush1.msra.mxu0 0.0
  %1985 = vmatprep.subr.mxu0 0.0
  %1986 = vmatpush1.msra.mxu0 0.0
  %1987 = vmatprep.subr.mxu0 0.0
  %1988 = vmatpush1.msra.mxu0 0.0
  %1989 = vmatprep.subr.mxu0 0.0
  %1990 = vmatpush1.msra.mxu0 0.0
  %1991 = vmatprep.subr.mxu0 0.0
  %1992 = vmatpush1.msra.mxu0 0.0
  %1993 = vmatprep.subr.mxu0 0.0
  %1994 = vmatpush1.msra.mxu0 0.0
  %1995 = vmatprep.subr.mxu0 0.0
  %1996 = vmatpush1.msra.mxu0 0.0
  %1997 = vmatprep.subr.mxu0 0.0
  %1998 = vmatpush1.msra.mxu0 0.0
  %1999 = vmatprep.subr.mxu0 0.0
  %2000 = vmatpush1.msra.mxu0 0.0
  %2001 = vmatprep.subr.mxu0 0.0
  %2002 = vmatpush1.msra.mxu0 0.0
  %2003 = vmatprep.mubr.f32.mxu0 0.0
  %2004 = vmatmul.mubr.f32.gmra.mrb[0].mxu0 %v1934
  %v2005 = vpop.f32.mrb[0].mxu0
  %v2006 = vadd.f32 0.0, %v2005
  %v2007 = vpop.f32.mrb[0].mxu0
  %2008 = vmatprep.mubr.f32.mxu0 0.0
  %2009 = vmatmul.mubr.f32.gmra.mrb[0].mxu0 %v1937
  %v2010 = vpop.f32.mrb[0].mxu0
  %v2011 = vadd.f32 0.0, %v2010
  %v2012 = vpop.f32.mrb[0].mxu0
  %2013 = vdwg.mxu0
  %v2015 = vsel %vm1512, %v1675, 0
  %v2018 = vsel %vm1512, %v1677, 0
  %2020 = vmatprep.subr.mxu0 0.0
  %2021 = vmatpush1.msra.mxu0 %v616
  %2022 = vmatprep.subr.mxu0 0.0
  %2023 = vmatpush1.msra.mxu0 %v618
  %2024 = vmatprep.subr.mxu0 0.0
  %2025 = vmatpush1.msra.mxu0 0.0
  %2026 = vmatprep.subr.mxu0 0.0
  %2027 = vmatpush1.msra.mxu0 0.0
  %2028 = vmatprep.subr.mxu0 0.0
  %2029 = vmatpush1.msra.mxu0 0.0
  %2030 = vmatprep.subr.mxu0 0.0
  %2031 = vmatpush1.msra.mxu0 0.0
  %2032 = vmatprep.subr.mxu0 0.0
  %2033 = vmatpush1.msra.mxu0 0.0
  %2034 = vmatprep.subr.mxu0 0.0
  %2035 = vmatpush1.msra.mxu0 0.0
  %2036 = vmatprep.subr.mxu0 0.0
  %2037 = vmatpush1.msra.mxu0 0.0
  %2038 = vmatprep.subr.mxu0 0.0
  %2039 = vmatpush1.msra.mxu0 0.0
  %2040 = vmatprep.subr.mxu0 0.0
  %2041 = vmatpush1.msra.mxu0 0.0
  %2042 = vmatprep.subr.mxu0 0.0
  %2043 = vmatpush1.msra.mxu0 0.0
  %2044 = vmatprep.subr.mxu0 0.0
  %2045 = vmatpush1.msra.mxu0 0.0
  %2046 = vmatprep.subr.mxu0 0.0
  %2047 = vmatpush1.msra.mxu0 0.0
  %2048 = vmatprep.subr.mxu0 0.0
  %2049 = vmatpush1.msra.mxu0 0.0
  %2050 = vmatprep.subr.mxu0 0.0
  %2051 = vmatpush1.msra.mxu0 0.0
  %2052 = vmatprep.subr.mxu0 0.0
  %2053 = vmatpush1.msra.mxu0 0.0
  %2054 = vmatprep.subr.mxu0 0.0
  %2055 = vmatpush1.msra.mxu0 0.0
  %2056 = vmatprep.subr.mxu0 0.0
  %2057 = vmatpush1.msra.mxu0 0.0
  %2058 = vmatprep.subr.mxu0 0.0
  %2059 = vmatpush1.msra.mxu0 0.0
  %2060 = vmatprep.subr.mxu0 0.0
  %2061 = vmatpush1.msra.mxu0 0.0
  %2062 = vmatprep.subr.mxu0 0.0
  %2063 = vmatpush1.msra.mxu0 0.0
  %2064 = vmatprep.subr.mxu0 0.0
  %2065 = vmatpush1.msra.mxu0 0.0
  %2066 = vmatprep.subr.mxu0 0.0
  %2067 = vmatpush1.msra.mxu0 0.0
  %2068 = vmatprep.subr.mxu0 0.0
  %2069 = vmatpush1.msra.mxu0 0.0
  %2070 = vmatprep.subr.mxu0 0.0
  %2071 = vmatpush1.msra.mxu0 0.0
  %2072 = vmatprep.subr.mxu0 0.0
  %2073 = vmatpush1.msra.mxu0 0.0
  %2074 = vmatprep.subr.mxu0 0.0
  %2075 = vmatpush1.msra.mxu0 0.0
  %2076 = vmatprep.subr.mxu0 0.0
  %2077 = vmatpush1.msra.mxu0 0.0
  %2078 = vmatprep.subr.mxu0 0.0
  %2079 = vmatpush1.msra.mxu0 0.0
  %2080 = vmatprep.subr.mxu0 0.0
  %2081 = vmatpush1.msra.mxu0 0.0
  %2082 = vmatprep.subr.mxu0 0.0
  %2083 = vmatpush1.msra.mxu0 0.0
  %2084 = vmatprep.mubr.f32.mxu0 0.0
  %2085 = vmatmul.mubr.f32.gmra.mrb[0].mxu0 %v2015
  %v2086 = vpop.f32.mrb[0].mxu0
  %v2087 = vadd.f32 0.0, %v2086
  %v2088 = vpop.f32.mrb[0].mxu0
  %2089 = vmatprep.mubr.f32.mxu0 0.0
  %2090 = vmatmul.mubr.f32.gmra.mrb[0].mxu0 %v2018
  %v2091 = vpop.f32.mrb[0].mxu0
  %v2092 = vadd.f32 0.0, %v2091
  %v2093 = vpop.f32.mrb[0].mxu0
  %2094 = vdwg.mxu0
  %v2096 = vsel %vm1512, %v1679, 0
  %v2099 = vsel %vm1512, %v1681, 0
  %2101 = vmatprep.subr.mxu0 0.0
  %2102 = vmatpush1.msra.mxu0 %v620
  %2103 = vmatprep.subr.mxu0 0.0
  %2104 = vmatpush1.msra.mxu0 %v622
  %2105 = vmatprep.subr.mxu0 0.0
  %2106 = vmatpush1.msra.mxu0 0.0
  %2107 = vmatprep.subr.mxu0 0.0
  %2108 = vmatpush1.msra.mxu0 0.0
  %2109 = vmatprep.subr.mxu0 0.0
  %2110 = vmatpush1.msra.mxu0 0.0
  %2111 = vmatprep.subr.mxu0 0.0
  %2112 = vmatpush1.msra.mxu0 0.0
  %2113 = vmatprep.subr.mxu0 0.0
  %2114 = vmatpush1.msra.mxu0 0.0
  %2115 = vmatprep.subr.mxu0 0.0
  %2116 = vmatpush1.msra.mxu0 0.0
  %2117 = vmatprep.subr.mxu0 0.0
  %2118 = vmatpush1.msra.mxu0 0.0
  %2119 = vmatprep.subr.mxu0 0.0
  %2120 = vmatpush1.msra.mxu0 0.0
  %2121 = vmatprep.subr.mxu0 0.0
  %2122 = vmatpush1.msra.mxu0 0.0
  %2123 = vmatprep.subr.mxu0 0.0
  %2124 = vmatpush1.msra.mxu0 0.0
  %2125 = vmatprep.subr.mxu0 0.0
  %2126 = vmatpush1.msra.mxu0 0.0
  %2127 = vmatprep.subr.mxu0 0.0
  %2128 = vmatpush1.msra.mxu0 0.0
  %2129 = vmatprep.subr.mxu0 0.0
  %2130 = vmatpush1.msra.mxu0 0.0
  %2131 = vmatprep.subr.mxu0 0.0
  %2132 = vmatpush1.msra.mxu0 0.0
  %2133 = vmatprep.subr.mxu0 0.0
  %2134 = vmatpush1.msra.mxu0 0.0
  %2135 = vmatprep.subr.mxu0 0.0
  %2136 = vmatpush1.msra.mxu0 0.0
  %2137 = vmatprep.subr.mxu0 0.0
  %2138 = vmatpush1.msra.mxu0 0.0
  %2139 = vmatprep.subr.mxu0 0.0
  %2140 = vmatpush1.msra.mxu0 0.0
  %2141 = vmatprep.subr.mxu0 0.0
  %2142 = vmatpush1.msra.mxu0 0.0
  %2143 = vmatprep.subr.mxu0 0.0
  %2144 = vmatpush1.msra.mxu0 0.0
  %2145 = vmatprep.subr.mxu0 0.0
  %2146 = vmatpush1.msra.mxu0 0.0
  %2147 = vmatprep.subr.mxu0 0.0
  %2148 = vmatpush1.msra.mxu0 0.0
  %2149 = vmatprep.subr.mxu0 0.0
  %2150 = vmatpush1.msra.mxu0 0.0
  %2151 = vmatprep.subr.mxu0 0.0
  %2152 = vmatpush1.msra.mxu0 0.0
  %2153 = vmatprep.subr.mxu0 0.0
  %2154 = vmatpush1.msra.mxu0 0.0
  %2155 = vmatprep.subr.mxu0 0.0
  %2156 = vmatpush1.msra.mxu0 0.0
  %2157 = vmatprep.subr.mxu0 0.0
  %2158 = vmatpush1.msra.mxu0 0.0
  %2159 = vmatprep.subr.mxu0 0.0
  %2160 = vmatpush1.msra.mxu0 0.0
  %2161 = vmatprep.subr.mxu0 0.0
  %2162 = vmatpush1.msra.mxu0 0.0
  %2163 = vmatprep.subr.mxu0 0.0
  %2164 = vmatpush1.msra.mxu0 0.0
  %2165 = vmatprep.mubr.f32.mxu0 0.0
  %2166 = vmatmul.mubr.f32.gmra.mrb[0].mxu0 %v2096
  %v2167 = vpop.f32.mrb[0].mxu0
  %v2168 = vadd.f32 0.0, %v2167
  %v2169 = vpop.f32.mrb[0].mxu0
  %2170 = vmatprep.mubr.f32.mxu0 0.0
  %2171 = vmatmul.mubr.f32.gmra.mrb[0].mxu0 %v2099
  %v2172 = vpop.f32.mrb[0].mxu0
  %v2173 = vadd.f32 0.0, %v2172
  %v2174 = vpop.f32.mrb[0].mxu0
  %2175 = vdwg.mxu0
  %v2177 = vsel %vm1512, %v1683, 0
  %v2180 = vsel %vm1512, %v1685, 0
  %2182 = vmatprep.subr.mxu0 0.0
  %2183 = vmatpush1.msra.mxu0 %v624
  %2184 = vmatprep.subr.mxu0 0.0
  %2185 = vmatpush1.msra.mxu0 %v626
  %2186 = vmatprep.subr.mxu0 0.0
  %2187 = vmatpush1.msra.mxu0 0.0
  %2188 = vmatprep.subr.mxu0 0.0
  %2189 = vmatpush1.msra.mxu0 0.0
  %2190 = vmatprep.subr.mxu0 0.0
  %2191 = vmatpush1.msra.mxu0 0.0
  %2192 = vmatprep.subr.mxu0 0.0
  %2193 = vmatpush1.msra.mxu0 0.0
  %2194 = vmatprep.subr.mxu0 0.0
  %2195 = vmatpush1.msra.mxu0 0.0
  %2196 = vmatprep.subr.mxu0 0.0
  %2197 = vmatpush1.msra.mxu0 0.0
  %2198 = vmatprep.subr.mxu0 0.0
  %2199 = vmatpush1.msra.mxu0 0.0
  %2200 = vmatprep.subr.mxu0 0.0
  %2201 = vmatpush1.msra.mxu0 0.0
  %2202 = vmatprep.subr.mxu0 0.0
  %2203 = vmatpush1.msra.mxu0 0.0
  %2204 = vmatprep.subr.mxu0 0.0
  %2205 = vmatpush1.msra.mxu0 0.0
  %2206 = vmatprep.subr.mxu0 0.0
  %2207 = vmatpush1.msra.mxu0 0.0
  %2208 = vmatprep.subr.mxu0 0.0
  %2209 = vmatpush1.msra.mxu0 0.0
  %2210 = vmatprep.subr.mxu0 0.0
  %2211 = vmatpush1.msra.mxu0 0.0
  %2212 = vmatprep.subr.mxu0 0.0
  %2213 = vmatpush1.msra.mxu0 0.0
  %2214 = vmatprep.subr.mxu0 0.0
  %2215 = vmatpush1.msra.mxu0 0.0
  %2216 = vmatprep.subr.mxu0 0.0
  %2217 = vmatpush1.msra.mxu0 0.0
  %2218 = vmatprep.subr.mxu0 0.0
  %2219 = vmatpush1.msra.mxu0 0.0
  %2220 = vmatprep.subr.mxu0 0.0
  %2221 = vmatpush1.msra.mxu0 0.0
  %2222 = vmatprep.subr.mxu0 0.0
  %2223 = vmatpush1.msra.mxu0 0.0
  %2224 = vmatprep.subr.mxu0 0.0
  %2225 = vmatpush1.msra.mxu0 0.0
  %2226 = vmatprep.subr.mxu0 0.0
  %2227 = vmatpush1.msra.mxu0 0.0
  %2228 = vmatprep.subr.mxu0 0.0
  %2229 = vmatpush1.msra.mxu0 0.0
  %2230 = vmatprep.subr.mxu0 0.0
  %2231 = vmatpush1.msra.mxu0 0.0
  %2232 = vmatprep.subr.mxu0 0.0
  %2233 = vmatpush1.msra.mxu0 0.0
  %2234 = vmatprep.subr.mxu0 0.0
  %2235 = vmatpush1.msra.mxu0 0.0
  %2236 = vmatprep.subr.mxu0 0.0
  %2237 = vmatpush1.msra.mxu0 0.0
  %2238 = vmatprep.subr.mxu0 0.0
  %2239 = vmatpush1.msra.mxu0 0.0
  %2240 = vmatprep.subr.mxu0 0.0
  %2241 = vmatpush1.msra.mxu0 0.0
  %2242 = vmatprep.subr.mxu0 0.0
  %2243 = vmatpush1.msra.mxu0 0.0
  %2244 = vmatprep.subr.mxu0 0.0
  %2245 = vmatpush1.msra.mxu0 0.0
  %2246 = vmatprep.mubr.f32.mxu0 0.0
  %2247 = vmatmul.mubr.f32.gmra.mrb[0].mxu0 %v2177
  %v2248 = vpop.f32.mrb[0].mxu0
  %v2249 = vadd.f32 0.0, %v2248
  %v2250 = vpop.f32.mrb[0].mxu0
  %2251 = vmatprep.mubr.f32.mxu0 0.0
  %2252 = vmatmul.mubr.f32.gmra.mrb[0].mxu0 %v2180
  %v2253 = vpop.f32.mrb[0].mxu0
  %v2254 = vadd.f32 0.0, %v2253
  %v2255 = vpop.f32.mrb[0].mxu0
  %2256 = vdwg.mxu0
  %v2258 = vsel %vm1512, %v1687, 0
  %v2261 = vsel %vm1512, %v1689, 0
  %2263 = vmatprep.subr.mxu0 0.0
  %2264 = vmatpush1.msra.mxu0 %v628
  %2265 = vmatprep.subr.mxu0 0.0
  %2266 = vmatpush1.msra.mxu0 %v630
  %2267 = vmatprep.subr.mxu0 0.0
  %2268 = vmatpush1.msra.mxu0 0.0
  %2269 = vmatprep.subr.mxu0 0.0
  %2270 = vmatpush1.msra.mxu0 0.0
  %2271 = vmatprep.subr.mxu0 0.0
  %2272 = vmatpush1.msra.mxu0 0.0
  %2273 = vmatprep.subr.mxu0 0.0
  %2274 = vmatpush1.msra.mxu0 0.0
  %2275 = vmatprep.subr.mxu0 0.0
  %2276 = vmatpush1.msra.mxu0 0.0
  %2277 = vmatprep.subr.mxu0 0.0
  %2278 = vmatpush1.msra.mxu0 0.0
  %2279 = vmatprep.subr.mxu0 0.0
  %2280 = vmatpush1.msra.mxu0 0.0
  %2281 = vmatprep.subr.mxu0 0.0
  %2282 = vmatpush1.msra.mxu0 0.0
  %2283 = vmatprep.subr.mxu0 0.0
  %2284 = vmatpush1.msra.mxu0 0.0
  %2285 = vmatprep.subr.mxu0 0.0
  %2286 = vmatpush1.msra.mxu0 0.0
  %2287 = vmatprep.subr.mxu0 0.0
  %2288 = vmatpush1.msra.mxu0 0.0
  %2289 = vmatprep.subr.mxu0 0.0
  %2290 = vmatpush1.msra.mxu0 0.0
  %2291 = vmatprep.subr.mxu0 0.0
  %2292 = vmatpush1.msra.mxu0 0.0
  %2293 = vmatprep.subr.mxu0 0.0
  %2294 = vmatpush1.msra.mxu0 0.0
  %2295 = vmatprep.subr.mxu0 0.0
  %2296 = vmatpush1.msra.mxu0 0.0
  %2297 = vmatprep.subr.mxu0 0.0
  %2298 = vmatpush1.msra.mxu0 0.0
  %2299 = vmatprep.subr.mxu0 0.0
  %2300 = vmatpush1.msra.mxu0 0.0
  %2301 = vmatprep.subr.mxu0 0.0
  %2302 = vmatpush1.msra.mxu0 0.0
  %2303 = vmatprep.subr.mxu0 0.0
  %2304 = vmatpush1.msra.mxu0 0.0
  %2305 = vmatprep.subr.mxu0 0.0
  %2306 = vmatpush1.msra.mxu0 0.0
  %2307 = vmatprep.subr.mxu0 0.0
  %2308 = vmatpush1.msra.mxu0 0.0
  %2309 = vmatprep.subr.mxu0 0.0
  %2310 = vmatpush1.msra.mxu0 0.0
  %2311 = vmatprep.subr.mxu0 0.0
  %2312 = vmatpush1.msra.mxu0 0.0
  %2313 = vmatprep.subr.mxu0 0.0
  %2314 = vmatpush1.msra.mxu0 0.0
  %2315 = vmatprep.subr.mxu0 0.0
  %2316 = vmatpush1.msra.mxu0 0.0
  %2317 = vmatprep.subr.mxu0 0.0
  %2318 = vmatpush1.msra.mxu0 0.0
  %2319 = vmatprep.subr.mxu0 0.0
  %2320 = vmatpush1.msra.mxu0 0.0
  %2321 = vmatprep.subr.mxu0 0.0
  %2322 = vmatpush1.msra.mxu0 0.0
  %2323 = vmatprep.subr.mxu0 0.0
  %2324 = vmatpush1.msra.mxu0 0.0
  %2325 = vmatprep.subr.mxu0 0.0
  %2326 = vmatpush1.msra.mxu0 0.0
  %2327 = vmatprep.mubr.f32.mxu0 0.0
  %2328 = vmatmul.mubr.f32.gmra.mrb[0].mxu0 %v2258
  %v2329 = vpop.f32.mrb[0].mxu0
  %v2330 = vadd.f32 0.0, %v2329
  %v2331 = vpop.f32.mrb[0].mxu0
  %2332 = vmatprep.mubr.f32.mxu0 0.0
  %2333 = vmatmul.mubr.f32.gmra.mrb[0].mxu0 %v2261
  %v2334 = vpop.f32.mrb[0].mxu0
  %v2335 = vadd.f32 0.0, %v2334
  %v2336 = vpop.f32.mrb[0].mxu0
  %2337 = vdwg.mxu0
  %v2346 = vcombine.high %v1763, %v1763
  %v2348 = vunpack.c.l.s4 1983009808
  %v2349 = vunpack.c.0.s8 %v2348
  %v2350 = vlaneseq
  %v2351 = vshrl.u32 %v2350, 7
  %v2352 = vsub.s32 %v2349, %v2351
  %v2353 = vrot.slane %v1763, %v2352
  %v2355 = vunpack.c.l.s4 1983009808
  %v2356 = vunpack.c.0.s8 %v2355
  %v2357 = vlaneseq
  %v2358 = vshrl.u32 %v2357, 7
  %v2359 = vsub.s32 %v2356, %v2358
  %v2360 = vrot.slane %v2346, %v2359
  %v2361 = vcombine.high %v2353, %v2353
  %v2362 = vcombine.high %v2360, %v2360
  %v2364 = vunpack.c.l.s4 1983009808
  %v2365 = vunpack.c.0.s8 %v2364
  %v2366 = vlaneseq
  %v2367 = vshrl.u32 %v2366, 7
  %v2368 = vsub.s32 %v2365, %v2367
  %v2369 = vrot.slane %v1768, %v2368
  %v2370 = vcombine.high %v1844, %v1844
  %v2372 = vunpack.c.l.s4 1983009808
  %v2373 = vunpack.c.0.s8 %v2372
  %v2374 = vlaneseq
  %v2375 = vshrl.u32 %v2374, 7
  %v2376 = vsub.s32 %v2373, %v2375
  %v2377 = vrot.slane %v1844, %v2376
  %v2379 = vunpack.c.l.s4 1983009808
  %v2380 = vunpack.c.0.s8 %v2379
  %v2381 = vlaneseq
  %v2382 = vshrl.u32 %v2381, 7
  %v2383 = vsub.s32 %v2380, %v2382
  %v2384 = vrot.slane %v2370, %v2383
  %v2385 = vcombine.high %v2377, %v2377
  %v2386 = vcombine.high %v2384, %v2384
  %v2388 = vunpack.c.l.s4 1983009808
  %v2389 = vunpack.c.0.s8 %v2388
  %v2390 = vlaneseq
  %v2391 = vshrl.u32 %v2390, 7
  %v2392 = vsub.s32 %v2389, %v2391
  %v2393 = vrot.slane %v1849, %v2392
  %v2394 = vcombine.high %v1925, %v1925
  %v2396 = vunpack.c.l.s4 1983009808
  %v2397 = vunpack.c.0.s8 %v2396
  %v2398 = vlaneseq
  %v2399 = vshrl.u32 %v2398, 7
  %v2400 = vsub.s32 %v2397, %v2399
  %v2401 = vrot.slane %v1925, %v2400
  %v2403 = vunpack.c.l.s4 1983009808
  %v2404 = vunpack.c.0.s8 %v2403
  %v2405 = vlaneseq
  %v2406 = vshrl.u32 %v2405, 7
  %v2407 = vsub.s32 %v2404, %v2406
  %v2408 = vrot.slane %v2394, %v2407
  %v2409 = vcombine.high %v2401, %v2401
  %v2410 = vcombine.high %v2408, %v2408
  %v2412 = vunpack.c.l.s4 1983009808
  %v2413 = vunpack.c.0.s8 %v2412
  %v2414 = vlaneseq
  %v2415 = vshrl.u32 %v2414, 7
  %v2416 = vsub.s32 %v2413, %v2415
  %v2417 = vrot.slane %v1930, %v2416
  %v2418 = vcombine.high %v2006, %v2006
  %v2420 = vunpack.c.l.s4 1983009808
  %v2421 = vunpack.c.0.s8 %v2420
  %v2422 = vlaneseq
  %v2423 = vshrl.u32 %v2422, 7
  %v2424 = vsub.s32 %v2421, %v2423
  %v2425 = vrot.slane %v2006, %v2424
  %v2427 = vunpack.c.l.s4 1983009808
  %v2428 = vunpack.c.0.s8 %v2427
  %v2429 = vlaneseq
  %v2430 = vshrl.u32 %v2429, 7
  %v2431 = vsub.s32 %v2428, %v2430
  %v2432 = vrot.slane %v2418, %v2431
  %v2433 = vcombine.high %v2425, %v2425
  %v2434 = vcombine.high %v2432, %v2432
  %v2436 = vunpack.c.l.s4 1983009808
  %v2437 = vunpack.c.0.s8 %v2436
  %v2438 = vlaneseq
  %v2439 = vshrl.u32 %v2438, 7
  %v2440 = vsub.s32 %v2437, %v2439
  %v2441 = vrot.slane %v2011, %v2440
  %v2450 = vcombine.high %v2087, %v2087
  %v2452 = vunpack.c.l.s4 1983009808
  %v2453 = vunpack.c.0.s8 %v2452
  %v2454 = vlaneseq
  %v2455 = vshrl.u32 %v2454, 7
  %v2456 = vsub.s32 %v2453, %v2455
  %v2457 = vrot.slane %v2087, %v2456
  %v2459 = vunpack.c.l.s4 1983009808
  %v2460 = vunpack.c.0.s8 %v2459
  %v2461 = vlaneseq
  %v2462 = vshrl.u32 %v2461, 7
  %v2463 = vsub.s32 %v2460, %v2462
  %v2464 = vrot.slane %v2450, %v2463
  %v2465 = vcombine.high %v2457, %v2457
  %v2466 = vcombine.high %v2464, %v2464
  %v2468 = vunpack.c.l.s4 1983009808
  %v2469 = vunpack.c.0.s8 %v2468
  %v2470 = vlaneseq
  %v2471 = vshrl.u32 %v2470, 7
  %v2472 = vsub.s32 %v2469, %v2471
  %v2473 = vrot.slane %v2092, %v2472
  %v2474 = vcombine.high %v2168, %v2168
  %v2476 = vunpack.c.l.s4 1983009808
  %v2477 = vunpack.c.0.s8 %v2476
  %v2478 = vlaneseq
  %v2479 = vshrl.u32 %v2478, 7
  %v2480 = vsub.s32 %v2477, %v2479
  %v2481 = vrot.slane %v2168, %v2480
  %v2483 = vunpack.c.l.s4 1983009808
  %v2484 = vunpack.c.0.s8 %v2483
  %v2485 = vlaneseq
  %v2486 = vshrl.u32 %v2485, 7
  %v2487 = vsub.s32 %v2484, %v2486
  %v2488 = vrot.slane %v2474, %v2487
  %v2489 = vcombine.high %v2481, %v2481
  %v2490 = vcombine.high %v2488, %v2488
  %v2492 = vunpack.c.l.s4 1983009808
  %v2493 = vunpack.c.0.s8 %v2492
  %v2494 = vlaneseq
  %v2495 = vshrl.u32 %v2494, 7
  %v2496 = vsub.s32 %v2493, %v2495
  %v2497 = vrot.slane %v2173, %v2496
  %v2498 = vcombine.high %v2249, %v2249
  %v2500 = vunpack.c.l.s4 1983009808
  %v2501 = vunpack.c.0.s8 %v2500
  %v2502 = vlaneseq
  %v2503 = vshrl.u32 %v2502, 7
  %v2504 = vsub.s32 %v2501, %v2503
  %v2505 = vrot.slane %v2249, %v2504
  %v2507 = vunpack.c.l.s4 1983009808
  %v2508 = vunpack.c.0.s8 %v2507
  %v2509 = vlaneseq
  %v2510 = vshrl.u32 %v2509, 7
  %v2511 = vsub.s32 %v2508, %v2510
  %v2512 = vrot.slane %v2498, %v2511
  %v2513 = vcombine.high %v2505, %v2505
  %v2514 = vcombine.high %v2512, %v2512
  %v2516 = vunpack.c.l.s4 1983009808
  %v2517 = vunpack.c.0.s8 %v2516
  %v2518 = vlaneseq
  %v2519 = vshrl.u32 %v2518, 7
  %v2520 = vsub.s32 %v2517, %v2519
  %v2521 = vrot.slane %v2254, %v2520
  %v2522 = vcombine.high %v2330, %v2330
  %v2524 = vunpack.c.l.s4 1983009808
  %v2525 = vunpack.c.0.s8 %v2524
  %v2526 = vlaneseq
  %v2527 = vshrl.u32 %v2526, 7
  %v2528 = vsub.s32 %v2525, %v2527
  %v2529 = vrot.slane %v2330, %v2528
  %v2531 = vunpack.c.l.s4 1983009808
  %v2532 = vunpack.c.0.s8 %v2531
  %v2533 = vlaneseq
  %v2534 = vshrl.u32 %v2533, 7
  %v2535 = vsub.s32 %v2532, %v2534
  %v2536 = vrot.slane %v2522, %v2535
  %v2537 = vcombine.high %v2529, %v2529
  %v2538 = vcombine.high %v2536, %v2536
  %v2540 = vunpack.c.l.s4 1983009808
  %v2541 = vunpack.c.0.s8 %v2540
  %v2542 = vlaneseq
  %v2543 = vshrl.u32 %v2542, 7
  %v2544 = vsub.s32 %v2541, %v2543
  %v2545 = vrot.slane %v2335, %v2544
  %v2546 = vcombine.low %v2353, %v2361
  %v2547 = vcombine.low %v2360, %v2362
  %v2549 = vunpack.c.l.s4 1983009808
  %v2550 = vunpack.c.0.s8 %v2549
  %v2551 = vlaneseq
  %v2552 = vshrl.u32 %v2551, 7
  %v2553 = vsub.s32 %v2550, %v2552
  %v2554 = vrot.slane %v2546, %v2553
  %v2556 = vunpack.c.l.s4 1983009808
  %v2557 = vunpack.c.0.s8 %v2556
  %v2558 = vlaneseq
  %v2559 = vshrl.u32 %v2558, 7
  %v2560 = vsub.s32 %v2557, %v2559
  %v2561 = vrot.slane %v2547, %v2560
  %v2562 = vcombine.low %v2554, %v2561
  %v2563 = vcombine.low %v2369, %v2377
  %v2564 = vcombine.low %v2385, %v2384
  %v2566 = vunpack.c.l.s4 1983009808
  %v2567 = vunpack.c.0.s8 %v2566
  %v2568 = vlaneseq
  %v2569 = vshrl.u32 %v2568, 7
  %v2570 = vsub.s32 %v2567, %v2569
  %v2571 = vrot.slane %v2563, %v2570
  %v2573 = vunpack.c.l.s4 1983009808
  %v2574 = vunpack.c.0.s8 %v2573
  %v2575 = vlaneseq
  %v2576 = vshrl.u32 %v2575, 7
  %v2577 = vsub.s32 %v2574, %v2576
  %v2578 = vrot.slane %v2564, %v2577
  %v2579 = vcombine.low %v2571, %v2578
  %v2580 = vcombine.low %v2386, %v2393
  %v2581 = vcombine.low %v2401, %v2409
  %v2583 = vunpack.c.l.s4 1983009808
  %v2584 = vunpack.c.0.s8 %v2583
  %v2585 = vlaneseq
  %v2586 = vshrl.u32 %v2585, 7
  %v2587 = vsub.s32 %v2584, %v2586
  %v2588 = vrot.slane %v2580, %v2587
  %v2590 = vunpack.c.l.s4 1983009808
  %v2591 = vunpack.c.0.s8 %v2590
  %v2592 = vlaneseq
  %v2593 = vshrl.u32 %v2592, 7
  %v2594 = vsub.s32 %v2591, %v2593
  %v2595 = vrot.slane %v2581, %v2594
  %v2596 = vcombine.low %v2588, %v2595
  %v2597 = vcombine.low %v2408, %v2410
  %v2598 = vcombine.low %v2417, %v2425
  %v2600 = vunpack.c.l.s4 1983009808
  %v2601 = vunpack.c.0.s8 %v2600
  %v2602 = vlaneseq
  %v2603 = vshrl.u32 %v2602, 7
  %v2604 = vsub.s32 %v2601, %v2603
  %v2605 = vrot.slane %v2597, %v2604
  %v2607 = vunpack.c.l.s4 1983009808
  %v2608 = vunpack.c.0.s8 %v2607
  %v2609 = vlaneseq
  %v2610 = vshrl.u32 %v2609, 7
  %v2611 = vsub.s32 %v2608, %v2610
  %v2612 = vrot.slane %v2598, %v2611
  %v2613 = vcombine.low %v2605, %v2612
  %v2614 = vcombine.low %v2433, %v2432
  %v2615 = vcombine.low %v2434, %v2441
  %v2617 = vunpack.c.l.s4 1983009808
  %v2618 = vunpack.c.0.s8 %v2617
  %v2619 = vlaneseq
  %v2620 = vshrl.u32 %v2619, 7
  %v2621 = vsub.s32 %v2618, %v2620
  %v2622 = vrot.slane %v2614, %v2621
  %v2624 = vunpack.c.l.s4 1983009808
  %v2625 = vunpack.c.0.s8 %v2624
  %v2626 = vlaneseq
  %v2627 = vshrl.u32 %v2626, 7
  %v2628 = vsub.s32 %v2625, %v2627
  %v2629 = vrot.slane %v2615, %v2628
  %v2630 = vcombine.low %v2622, %v2629
  %v2636 = vcombine.low %v2457, %v2465
  %v2637 = vcombine.low %v2464, %v2466
  %v2639 = vunpack.c.l.s4 1983009808
  %v2640 = vunpack.c.0.s8 %v2639
  %v2641 = vlaneseq
  %v2642 = vshrl.u32 %v2641, 7
  %v2643 = vsub.s32 %v2640, %v2642
  %v2644 = vrot.slane %v2636, %v2643
  %v2646 = vunpack.c.l.s4 1983009808
  %v2647 = vunpack.c.0.s8 %v2646
  %v2648 = vlaneseq
  %v2649 = vshrl.u32 %v2648, 7
  %v2650 = vsub.s32 %v2647, %v2649
  %v2651 = vrot.slane %v2637, %v2650
  %v2652 = vcombine.low %v2644, %v2651
  %v2653 = vcombine.low %v2473, %v2481
  %v2654 = vcombine.low %v2489, %v2488
  %v2656 = vunpack.c.l.s4 1983009808
  %v2657 = vunpack.c.0.s8 %v2656
  %v2658 = vlaneseq
  %v2659 = vshrl.u32 %v2658, 7
  %v2660 = vsub.s32 %v2657, %v2659
  %v2661 = vrot.slane %v2653, %v2660
  %v2663 = vunpack.c.l.s4 1983009808
  %v2664 = vunpack.c.0.s8 %v2663
  %v2665 = vlaneseq
  %v2666 = vshrl.u32 %v2665, 7
  %v2667 = vsub.s32 %v2664, %v2666
  %v2668 = vrot.slane %v2654, %v2667
  %v2669 = vcombine.low %v2661, %v2668
  %v2670 = vcombine.low %v2490, %v2497
  %v2671 = vcombine.low %v2505, %v2513
  %v2673 = vunpack.c.l.s4 1983009808
  %v2674 = vunpack.c.0.s8 %v2673
  %v2675 = vlaneseq
  %v2676 = vshrl.u32 %v2675, 7
  %v2677 = vsub.s32 %v2674, %v2676
  %v2678 = vrot.slane %v2670, %v2677
  %v2680 = vunpack.c.l.s4 1983009808
  %v2681 = vunpack.c.0.s8 %v2680
  %v2682 = vlaneseq
  %v2683 = vshrl.u32 %v2682, 7
  %v2684 = vsub.s32 %v2681, %v2683
  %v2685 = vrot.slane %v2671, %v2684
  %v2686 = vcombine.low %v2678, %v2685
  %v2687 = vcombine.low %v2512, %v2514
  %v2688 = vcombine.low %v2521, %v2529
  %v2690 = vunpack.c.l.s4 1983009808
  %v2691 = vunpack.c.0.s8 %v2690
  %v2692 = vlaneseq
  %v2693 = vshrl.u32 %v2692, 7
  %v2694 = vsub.s32 %v2691, %v2693
  %v2695 = vrot.slane %v2687, %v2694
  %v2697 = vunpack.c.l.s4 1983009808
  %v2698 = vunpack.c.0.s8 %v2697
  %v2699 = vlaneseq
  %v2700 = vshrl.u32 %v2699, 7
  %v2701 = vsub.s32 %v2698, %v2700
  %v2702 = vrot.slane %v2688, %v2701
  %v2703 = vcombine.low %v2695, %v2702
  %v2704 = vcombine.low %v2537, %v2536
  %v2705 = vcombine.low %v2538, %v2545
  %v2707 = vunpack.c.l.s4 1983009808
  %v2708 = vunpack.c.0.s8 %v2707
  %v2709 = vlaneseq
  %v2710 = vshrl.u32 %v2709, 7
  %v2711 = vsub.s32 %v2708, %v2710
  %v2712 = vrot.slane %v2704, %v2711
  %v2714 = vunpack.c.l.s4 1983009808
  %v2715 = vunpack.c.0.s8 %v2714
  %v2716 = vlaneseq
  %v2717 = vshrl.u32 %v2716, 7
  %v2718 = vsub.s32 %v2715, %v2717
  %v2719 = vrot.slane %v2705, %v2718
  %v2720 = vcombine.low %v2712, %v2719
  %2721 = vrot.lane.b32.xlu0 %v2652, 5
  %v2722 = vpop.permute.xlu0 %2721
  %2723 = vrot.lane.b32.xlu0 %v2669, 5
  %v2724 = vpop.permute.xlu0 %2723
  %2725 = vrot.lane.b32.xlu0 %v2686, 5
  %v2726 = vpop.permute.xlu0 %2725
  %2727 = vrot.lane.b32.xlu0 %v2703, 5
  %v2728 = vpop.permute.xlu0 %2727
  %2729 = vrot.lane.b32.xlu0 %v2720, 5
  %v2730 = vpop.permute.xlu0 %2729
  %v2736 = vsel %vm663, %v2562, %v2722
  %v2737 = vsel %vm663, %v2579, %v2724
  %v2738 = vsel %vm663, %v2596, %v2726
  %v2739 = vsel %vm663, %v2613, %v2728
  %v2740 = vsel %vm663, %v2630, %v2730
  %v2741 = vld [vmem:[%s5] sm:$0xff]
  %v2742 = vld [vmem:[%s5 + $0x8] sm:$0x3]
  %v2743 = vld [vmem:[%s6] sm:$0x7]
  %v2744 = vlaneseq
  %v2745 = vshrl.u32 %v2744, 7
  %v2746 = vsub.s32 0, %v2745
  %v2747 = vrot.slane %v2743, %v2746
  %vm2748 = vcmask 80896
  %v2750 = vsel %vm2748, %v2736, 0
  %v2753 = vsel %vm2748, %v2737, 0
  %v2756 = vsel %vm2748, %v2738, 0
  %v2759 = vsel %vm2748, %v2739, 0
  %v2762 = vsel %vm2748, %v2740, 0
  %vm2764 = vcmask 1041408
  %v2766 = vsel %vm2764, %v2742, 0
  %2768 = vmatprep.subr.mxu0 0.0
  %2769 = vmatpush1.msra.mxu0 %v2741
  %2770 = vmatprep.subr.mxu0 0.0
  %2771 = vmatpush1.msra.mxu0 %v2766
  %2772 = vmatprep.subr.mxu0 0.0
  %2773 = vmatpush1.msra.mxu0 0.0
  %2774 = vmatprep.subr.mxu0 0.0
  %2775 = vmatpush1.msra.mxu0 0.0
  %2776 = vmatprep.subr.mxu0 0.0
  %2777 = vmatpush1.msra.mxu0 0.0
  %2778 = vmatprep.subr.mxu0 0.0
  %2779 = vmatpush1.msra.mxu0 0.0
  %2780 = vmatprep.subr.mxu0 0.0
  %2781 = vmatpush1.msra.mxu0 0.0
  %2782 = vmatprep.subr.mxu0 0.0
  %2783 = vmatpush1.msra.mxu0 0.0
  %2784 = vmatprep.subr.mxu0 0.0
  %2785 = vmatpush1.msra.mxu0 0.0
  %2786 = vmatprep.subr.mxu0 0.0
  %2787 = vmatpush1.msra.mxu0 0.0
  %2788 = vmatprep.subr.mxu0 0.0
  %2789 = vmatpush1.msra.mxu0 0.0
  %2790 = vmatprep.subr.mxu0 0.0
  %2791 = vmatpush1.msra.mxu0 0.0
  %2792 = vmatprep.subr.mxu0 0.0
  %2793 = vmatpush1.msra.mxu0 0.0
  %2794 = vmatprep.subr.mxu0 0.0
  %2795 = vmatpush1.msra.mxu0 0.0
  %2796 = vmatprep.subr.mxu0 0.0
  %2797 = vmatpush1.msra.mxu0 0.0
  %2798 = vmatprep.subr.mxu0 0.0
  %2799 = vmatpush1.msra.mxu0 0.0
  %2800 = vmatprep.subr.mxu0 0.0
  %2801 = vmatpush1.msra.mxu0 0.0
  %2802 = vmatprep.subr.mxu0 0.0
  %2803 = vmatpush1.msra.mxu0 0.0
  %2804 = vmatprep.subr.mxu0 0.0
  %2805 = vmatpush1.msra.mxu0 0.0
  %2806 = vmatprep.subr.mxu0 0.0
  %2807 = vmatpush1.msra.mxu0 0.0
  %2808 = vmatprep.subr.mxu0 0.0
  %2809 = vmatpush1.msra.mxu0 0.0
  %2810 = vmatprep.subr.mxu0 0.0
  %2811 = vmatpush1.msra.mxu0 0.0
  %2812 = vmatprep.subr.mxu0 0.0
  %2813 = vmatpush1.msra.mxu0 0.0
  %2814 = vmatprep.subr.mxu0 0.0
  %2815 = vmatpush1.msra.mxu0 0.0
  %2816 = vmatprep.subr.mxu0 0.0
  %2817 = vmatpush1.msra.mxu0 0.0
  %2818 = vmatprep.subr.mxu0 0.0
  %2819 = vmatpush1.msra.mxu0 0.0
  %2820 = vmatprep.subr.mxu0 0.0
  %2821 = vmatpush1.msra.mxu0 0.0
  %2822 = vmatprep.subr.mxu0 0.0
  %2823 = vmatpush1.msra.mxu0 0.0
  %2824 = vmatprep.subr.mxu0 0.0
  %2825 = vmatpush1.msra.mxu0 0.0
  %2826 = vmatprep.subr.mxu0 0.0
  %2827 = vmatpush1.msra.mxu0 0.0
  %2828 = vmatprep.subr.mxu0 0.0
  %2829 = vmatpush1.msra.mxu0 0.0
  %2830 = vmatprep.subr.mxu0 0.0
  %2831 = vmatpush1.msra.mxu0 0.0
  %2832 = vmatprep.mubr.f32.mxu0 0.0
  %2833 = vmatmul.mubr.f32.gmra.mrb[0].mxu0 %v2750
  %v2834 = vpop.f32.mrb[0].mxu0
  %v2835 = vadd.f32 %v2747, %v2834
  %v2836 = vpop.f32.mrb[0].mxu0
  %2837 = vmatprep.mubr.f32.mxu0 0.0
  %2838 = vmatmul.mubr.f32.gmra.mrb[0].mxu0 %v2753
  %v2839 = vpop.f32.mrb[0].mxu0
  %v2840 = vadd.f32 %v2747, %v2839
  %v2841 = vpop.f32.mrb[0].mxu0
  %2842 = vmatprep.mubr.f32.mxu0 0.0
  %2843 = vmatmul.mubr.f32.gmra.mrb[0].mxu0 %v2756
  %v2844 = vpop.f32.mrb[0].mxu0
  %v2845 = vadd.f32 %v2747, %v2844
  %v2846 = vpop.f32.mrb[0].mxu0
  %2847 = vmatprep.mubr.f32.mxu0 0.0
  %2848 = vmatmul.mubr.f32.gmra.mrb[0].mxu0 %v2759
  %v2849 = vpop.f32.mrb[0].mxu0
  %v2850 = vadd.f32 %v2747, %v2849
  %v2851 = vpop.f32.mrb[0].mxu0
  %2852 = vmatprep.mubr.f32.mxu0 0.0
  %2853 = vmatmul.mubr.f32.gmra.mrb[0].mxu0 %v2762
  %v2854 = vpop.f32.mrb[0].mxu0
  %v2855 = vadd.f32 %v2747, %v2854
  %v2856 = vpop.f32.mrb[0].mxu0
  %2857 = vdwg.mxu0
  %v2858 = vadd.f32 %v2835, %v26
  %v2859 = vadd.f32 %v2840, %v27
  %v2860 = vadd.f32 %v2845, %v28
  %v2861 = vadd.f32 %v2850, %v29
  %v2862 = vadd.f32 %v2855, %v30
  %v2863 = vsel %vm57, %v2858, 0.0
  %2864 = vadd.xlane.f32.xlu0 %v2863
  %v2865 = vpop.xlane.xlu0 %2864
  %v2866 = vsel %vm57, %v2859, 0.0
  %2867 = vadd.xlane.f32.xlu0 %v2866
  %v2868 = vpop.xlane.xlu0 %2867
  %v2869 = vsel %vm57, %v2860, 0.0
  %2870 = vadd.xlane.f32.xlu0 %v2869
  %v2871 = vpop.xlane.xlu0 %2870
  %v2872 = vsel %vm57, %v2861, 0.0
  %2873 = vadd.xlane.f32.xlu0 %v2872
  %v2874 = vpop.xlane.xlu0 %2873
  %v2875 = vsel %vm57, %v2862, 0.0
  %2876 = vadd.xlane.f32.xlu0 %v2875
  %v2877 = vpop.xlane.xlu0 %2876
  %v2878 = vrcp.pop 20.0
  %v2879 = vmul.f32 %v2865, %v2878
  %v2880 = vmul.f32 %v2868, %v2878
  %v2881 = vmul.f32 %v2871, %v2878
  %v2882 = vmul.f32 %v2874, %v2878
  %v2883 = vmul.f32 %v2877, %v2878
  %v2884 = vsub.f32 %v2858, %v2879
  %v2885 = vsub.f32 %v2859, %v2880
  %v2886 = vsub.f32 %v2860, %v2881
  %v2887 = vsub.f32 %v2861, %v2882
  %v2888 = vsub.f32 %v2862, %v2883
  %v2889 = vmul.f32 %v2884, %v2884
  %v2890 = vmul.f32 %v2885, %v2885
  %v2891 = vmul.f32 %v2886, %v2886
  %v2892 = vmul.f32 %v2887, %v2887
  %v2893 = vmul.f32 %v2888, %v2888
  %v2894 = vsel %vm57, %v2889, 0.0
  %2895 = vadd.xlane.f32.xlu0 %v2894
  %v2896 = vpop.xlane.xlu0 %2895
  %v2897 = vsel %vm57, %v2890, 0.0
  %2898 = vadd.xlane.f32.xlu0 %v2897
  %v2899 = vpop.xlane.xlu0 %2898
  %v2900 = vsel %vm57, %v2891, 0.0
  %2901 = vadd.xlane.f32.xlu0 %v2900
  %v2902 = vpop.xlane.xlu0 %2901
  %v2903 = vsel %vm57, %v2892, 0.0
  %2904 = vadd.xlane.f32.xlu0 %v2903
  %v2905 = vpop.xlane.xlu0 %2904
  %v2906 = vsel %vm57, %v2893, 0.0
  %2907 = vadd.xlane.f32.xlu0 %v2906
  %v2908 = vpop.xlane.xlu0 %2907
  %v2909 = vmul.f32 %v2896, %v2878
  %v2910 = vmul.f32 %v2899, %v2878
  %v2911 = vmul.f32 %v2902, %v2878
  %v2912 = vmul.f32 %v2905, %v2878
  %v2913 = vmul.f32 %v2908, %v2878
  %v2914 = vadd.f32 %v2909, 1e-05
  %v2915 = vadd.f32 %v2910, 1e-05
  %v2916 = vadd.f32 %v2911, 1e-05
  %v2917 = vadd.f32 %v2912, 1e-05
  %v2918 = vadd.f32 %v2913, 1e-05
  %v2919 = vrsqrt.pop %v2914
  %v2920 = vmul.f32 %v2914, %v2919
  %vm2921 = vcmp.eq.f32.partialorder %v2914, inf
  %v2922 = vsel %vm2921, %v2914, %v2920
  %vm2923 = vcmp.eq.f32.partialorder %v2914, 0.0
  %v2924 = vand.u32 %v2914, 2147483648
  %v2925 = vsel %vm2923, %v2924, %v2922
  %v2926 = vrsqrt.pop %v2915
  %v2927 = vmul.f32 %v2915, %v2926
  %vm2928 = vcmp.eq.f32.partialorder %v2915, inf
  %v2929 = vsel %vm2928, %v2915, %v2927
  %vm2930 = vcmp.eq.f32.partialorder %v2915, 0.0
  %v2931 = vand.u32 %v2915, 2147483648
  %v2932 = vsel %vm2930, %v2931, %v2929
  %v2933 = vrsqrt.pop %v2916
  %v2934 = vmul.f32 %v2916, %v2933
  %vm2935 = vcmp.eq.f32.partialorder %v2916, inf
  %v2936 = vsel %vm2935, %v2916, %v2934
  %vm2937 = vcmp.eq.f32.partialorder %v2916, 0.0
  %v2938 = vand.u32 %v2916, 2147483648
  %v2939 = vsel %vm2937, %v2938, %v2936
  %v2940 = vrsqrt.pop %v2917
  %v2941 = vmul.f32 %v2917, %v2940
  %vm2942 = vcmp.eq.f32.partialorder %v2917, inf
  %v2943 = vsel %vm2942, %v2917, %v2941
  %vm2944 = vcmp.eq.f32.partialorder %v2917, 0.0
  %v2945 = vand.u32 %v2917, 2147483648
  %v2946 = vsel %vm2944, %v2945, %v2943
  %v2947 = vrsqrt.pop %v2918
  %v2948 = vmul.f32 %v2918, %v2947
  %vm2949 = vcmp.eq.f32.partialorder %v2918, inf
  %v2950 = vsel %vm2949, %v2918, %v2948
  %vm2951 = vcmp.eq.f32.partialorder %v2918, 0.0
  %v2952 = vand.u32 %v2918, 2147483648
  %v2953 = vsel %vm2951, %v2952, %v2950
  %v2954 = vrcp.pop %v2925
  %v2955 = vmul.f32 %v2884, %v2954
  %v2956 = vrcp.pop %v2932
  %v2957 = vmul.f32 %v2885, %v2956
  %v2958 = vrcp.pop %v2939
  %v2959 = vmul.f32 %v2886, %v2958
  %v2960 = vrcp.pop %v2946
  %v2961 = vmul.f32 %v2887, %v2960
  %v2962 = vrcp.pop %v2953
  %v2963 = vmul.f32 %v2888, %v2962
  %v2964 = vlaneseq
  %v2965 = vshrl.u32 %v2964, 7
  %v2966 = vsub.s32 1, %v2965
  %v2967 = vrot.slane %v2743, %v2966
  %v2968 = vmul.f32 %v2955, %v2967
  %v2969 = vmul.f32 %v2957, %v2967
  %v2970 = vmul.f32 %v2959, %v2967
  %v2971 = vmul.f32 %v2961, %v2967
  %v2972 = vmul.f32 %v2963, %v2967
  %v2973 = vlaneseq
  %v2974 = vshrl.u32 %v2973, 7
  %v2975 = vsub.s32 2, %v2974
  %v2976 = vrot.slane %v2743, %v2975
  %v2977 = vadd.f32 %v2968, %v2976
  %v2978 = vadd.f32 %v2969, %v2976
  %v2979 = vadd.f32 %v2970, %v2976
  %v2980 = vadd.f32 %v2971, %v2976
  %v2981 = vadd.f32 %v2972, %v2976
  %2982 = vst.msk [vmem:[%s7] sm:$0xff] %vm57, %v2977
  %2983 = vst.msk [vmem:[%s7 + $0x8] sm:$0xff] %vm57, %v2978
  %2984 = vst.msk [vmem:[%s7 + $0x10] sm:$0xff] %vm57, %v2979
  %2985 = vst.msk [vmem:[%s7 + $0x18] sm:$0xff] %vm57, %v2980
  %2986 = vst.msk [vmem:[%s7 + $0x20] sm:$0xff] %vm57, %v2981
  // Predicated region
  $region30: #{tpu_custom_call.1} parent=0 // pred_check
    _
  $region31: #{tpu_custom_call.1} parent=0 // pred_check_branch
    %2988 = sbr.rel (0) target = $region33
  $region32: #{tpu_custom_call.1} parent=0 // pred_region
    _
  $region33: #{tpu_custom_call.1} parent=0 // pred_fallthru
    _
  // Predicated region
  $region34: #{tpu_custom_call.1} parent=0 // pred_check
    _
  $region35: #{tpu_custom_call.1} parent=0 // pred_check_branch
    %2990 = sbr.rel (0) target = $region37
  $region36: #{tpu_custom_call.1} parent=0 // pred_region
    _
  $region37: #{tpu_custom_call.1} parent=0 // pred_fallthru
    _

</llo_original>
